<compile_context>
chip_gen: v5e
topology: v5e:2x2
jax: 0.10.0
libtpu: 0.0.40
codegen_flags: <defaults>
</compile_context>

<pallas_src>
import functools
import math

import jax
import jax.numpy as jnp
from jax.experimental import pallas as pl
from jax.experimental.pallas import tpu as pltpu


def _attn_block_kernel(x_ref, ln1_w_ref, ln1_b_ref, wqkv_ref, bqkv_ref,
                       wo_ref, bo_ref, ln2_w_ref, ln2_b_ref,
                       w1_ref, b1_ref, w2_ref, b2_ref,
                       o_ref, heads_ref, *, num_head, n_img, seq, eps):
    x = x_ref[0]                                  # (C, L) f32, L = n_img * seq
    C, L = x.shape
    Dh = C // num_head
    scale = 1.0 / math.sqrt(Dh)
    inv_c = 1.0 / C
    bf16 = jnp.bfloat16

    def layer_norm(z, w, b):
        # Two-pass (centered) statistics over the channel (sublane) axis.
        mean = jnp.sum(z, axis=0, keepdims=True) * inv_c
        cent = z - mean
        var = jnp.sum(cent * cent, axis=0, keepdims=True) * inv_c
        return cent * jax.lax.rsqrt(var + eps) * w + b

    def gelu(z):
        # Exact erf-based GELU (PyTorch nn.GELU default) kept for parity.
        return 0.5 * z * (1.0 + jax.lax.erf(z * (1.0 / math.sqrt(2.0))))

    # ---- LayerNorm 1 (over channels) ----
    xn = layer_norm(x, ln1_w_ref[...], ln1_b_ref[...])

    # ---- fused QKV projection: (3C, C) @ (C, L) -> (3C, L), f32 accumulate ----
    qkv = jnp.dot(wqkv_ref[...], xn.astype(bf16),
                  preferred_element_type=jnp.float32) + bqkv_ref[...]
    q = qkv[0:C]
    k = qkv[C:2 * C]
    v = qkv[2 * C:3 * C]

    # ---- multi-head self-attention, heads batched per image ----
    for b in range(n_img):                        # attention is per-image
        lo = b * seq
        qb = q[:, lo:lo + seq].reshape(num_head, Dh, seq).astype(bf16)
        kb = k[:, lo:lo + seq].reshape(num_head, Dh, seq).astype(bf16)
        vb = v[:, lo:lo + seq].reshape(num_head, Dh, seq).astype(bf16)

        # scores[h, q_pos, k_pos], contraction over the head dim, f32 acc.
        s_hqk = jnp.einsum('hdq,hdk->hqk', qb, kb,
                           preferred_element_type=jnp.float32) * scale
        s_hqk = s_hqk - jnp.max(s_hqk, axis=-1, keepdims=True)
        p = jnp.exp(s_hqk)                        # f32 (v5e-safe)
        row_sum = jnp.sum(p, axis=-1, keepdims=True)
        p = p * pl.reciprocal(row_sum, approx=True)   # EUP, not VALU divide

        # out[h, d, q_pos] = sum_k vb[h, d, k] * p[h, q_pos, k]
        o_b = jnp.einsum('hdk,hqk->hdq', vb, p.astype(bf16),
                         preferred_element_type=jnp.float32)
        # Store already cast to bf16: out-proj reads bf16 directly.
        heads_ref[:, lo:lo + seq] = o_b.reshape(C, seq).astype(bf16)

    # ---- output projection + residual (one wide lane-dense matmul) ----
    attn = jnp.dot(wo_ref[...], heads_ref[...],
                   preferred_element_type=jnp.float32) + bo_ref[...]
    x1 = x + attn

    # ---- feed-forward: LN -> Linear -> GELU -> Linear, residual ----
    xn2 = layer_norm(x1, ln2_w_ref[...], ln2_b_ref[...])
    hmid = jnp.dot(w1_ref[...], xn2.astype(bf16),
                   preferred_element_type=jnp.float32) + b1_ref[...]
    g = gelu(hmid)
    ffo = jnp.dot(w2_ref[...], g.astype(bf16),
                  preferred_element_type=jnp.float32) + b2_ref[...]

    o_ref[0] = (x1 + ffo).astype(o_ref.dtype)


def image_attention_block(x, params, *, num_head, eps=1e-5, max_lane_block=2048):
    """x: (N, C, H, W) f32.  params: PyTorch-layout weights (see __main__)."""
    (ln1_w, ln1_b, wqkv, bqkv, wo, bo, ln2_w, ln2_b, w1, b1, w2, b2) = params
    N, C, H, W = x.shape
    S = H * W
    assert C % num_head == 0, "hidden_dim must be divisible by num_head"
    Dh = C // num_head
    assert C % 8 == 0 and Dh % 8 == 0, \
        "channels / head dim must be sublane (8) multiples for static slicing"

    # Fold Nb images into the lane axis per grid step (largest divisor of N
    # whose lane width stays under max_lane_block).
    Nb = 1
    for cand in range(1, N + 1):
        if N % cand == 0 and cand * S <= max(S, max_lane_block):
            Nb = cand
    G = N // Nb
    L = Nb * S

    # Layout plumbing in the wrapper: (N,C,H,W) -> (G, C, Nb*S), lanes = Nb*S.
    x_f = x.reshape(G, Nb, C, S).transpose(0, 2, 1, 3).reshape(G, C, L)

    bf16 = jnp.bfloat16
    f32 = jnp.float32
    col = lambda t: t.reshape(-1, 1).astype(f32)    # (E,) -> (E, 1) column

    args = (
        x_f,
        col(ln1_w), col(ln1_b),
        wqkv.astype(bf16), col(bqkv),
        wo.astype(bf16), col(bo),
        col(ln2_w), col(ln2_b),
        w1.astype(bf16), col(b1),
        w2.astype(bf16), col(b2),
    )

    def const(shape):
        nd = len(shape)
        return pl.BlockSpec(shape, lambda g, _nd=nd: (0,) * _nd)

    kernel = functools.partial(_attn_block_kernel, num_head=num_head,
                               n_img=Nb, seq=S, eps=eps)

    out = pl.pallas_call(
        kernel,
        out_shape=jax.ShapeDtypeStruct((G, C, L), x.dtype),
        grid_spec=pltpu.PrefetchScalarGridSpec(
            num_scalar_prefetch=0,
            grid=(G,),
            in_specs=[
                pl.BlockSpec((1, C, L), lambda g: (g, 0, 0)),
                const((C, 1)), const((C, 1)),            # LN1 weight / bias
                const((3 * C, C)), const((3 * C, 1)),    # fused QKV proj
                const((C, C)), const((C, 1)),            # out proj
                const((C, 1)), const((C, 1)),            # LN2 weight / bias
                const((C, C)), const((C, 1)),            # FF linear 1
                const((C, C)), const((C, 1)),            # FF linear 2
            ],
            out_specs=pl.BlockSpec((1, C, L), lambda g: (g, 0, 0)),
            scratch_shapes=[pltpu.VMEM((C, L), bf16)],   # bf16 head slab
        ),
        compiler_params=pltpu.CompilerParams(
            dimension_semantics=("parallel",)),
    )(*args)

    return out.reshape(G, C, Nb, S).transpose(0, 2, 1, 3).reshape(N, C, H, W)


def _reference(x, params, *, num_head, eps=1e-5):
    """Pure-JAX f32 replica of the PyTorch forward (LayerNorm/MHA/FFN)."""
    (ln1_w, ln1_b, wqkv, bqkv, wo, bo, ln2_w, ln2_b, w1, b1, w2, b2) = params
    N, C, H, W = x.shape
    S = H * W
    E = C
    Dh = E // num_head
    xs = x.reshape(N, C, S).transpose(0, 2, 1)              # (N, S, E)

    def ln(z, w, b):
        m = jnp.mean(z, axis=-1, keepdims=True)
        v = jnp.mean((z - m) ** 2, axis=-1, keepdims=True)
        return (z - m) / jnp.sqrt(v + eps) * w + b

    xn = ln(xs, ln1_w, ln1_b)
    qkv = xn @ wqkv.T + bqkv                                # (N, S, 3E)
    q, k, v = jnp.split(qkv, 3, axis=-1)

    def to_heads(t):
        return t.reshape(N, S, num_head, Dh).transpose(0, 2, 1, 3)

    qh, kh, vh = to_heads(q), to_heads(k), to_heads(v)
    scores = jnp.einsum("bhqd,bhkd->bhqk", qh, kh) / math.sqrt(Dh)
    p = jax.nn.softmax(scores, axis=-1)
    oh = jnp.einsum("bhqk,bhkd->bhqd", p, vh)
    attn = oh.transpose(0, 2, 1, 3).reshape(N, S, E) @ wo.T + bo
    x1 = xs + attn
    xn2 = ln(x1, ln2_w, ln2_b)
    hmid = xn2 @ w1.T + b1
    g = 0.5 * hmid * (1.0 + jax.lax.erf(hmid / math.sqrt(2.0)))
    x2 = x1 + (g @ w2.T + b2)
    return x2.transpose(0, 2, 1).reshape(N, C, H, W)


if __name__ == "__main__":
    N, hidden_dim, image_size, num_head = 2, 32, 8, 4
    E = hidden_dim

    key = jax.random.PRNGKey(0)
    ks = jax.random.split(key, 13)
    x = jax.random.normal(ks[0], (N, hidden_dim, image_size, image_size),
                          dtype=jnp.float32)

    s = 1.0 / math.sqrt(E)
    ln1_w = 1.0 + 0.1 * jax.random.normal(ks[1], (E,), jnp.float32)
    ln1_b = 0.1 * jax.random.normal(ks[2], (E,), jnp.float32)
    wqkv = s * jax.random.normal(ks[3], (3 * E, E), jnp.float32)
    bqkv = 0.1 * jax.random.normal(ks[4], (3 * E,), jnp.float32)
    wo = s * jax.random.normal(ks[5], (E, E), jnp.float32)
    bo = 0.1 * jax.random.normal(ks[6], (E,), jnp.float32)
    ln2_w = 1.0 + 0.1 * jax.random.normal(ks[7], (E,), jnp.float32)
    ln2_b = 0.1 * jax.random.normal(ks[8], (E,), jnp.float32)
    w1 = s * jax.random.normal(ks[9], (E, E), jnp.float32)
    b1 = 0.1 * jax.random.normal(ks[10], (E,), jnp.float32)
    w2 = s * jax.random.normal(ks[11], (E, E), jnp.float32)
    b2 = 0.1 * jax.random.normal(ks[12], (E,), jnp.float32)
    params = (ln1_w, ln1_b, wqkv, bqkv, wo, bo, ln2_w, ln2_b, w1, b1, w2, b2)

    out = image_attention_block(x, params, num_head=num_head)
    out = jax.block_until_ready(out)

    ref = _reference(x, params, num_head=num_head)
    assert out.shape == x.shape
    assert bool(jnp.all(jnp.isfinite(out)))
    max_err = float(jnp.max(jnp.abs(out - ref)))
    assert bool(jnp.allclose(out, ref, atol=3e-2, rtol=3e-2)), \
        f"mismatch vs reference, max abs err = {max_err}"

    print("KERNEL_OK")
</pallas_src>

<mosaic_0001>
module attributes {stable_mosaic.version = 11 : i64} {
  func.func @_attn_block_kernel(%arg0: i32, %arg1: memref<1x32x128xf32, #tpu.memory_space<vmem>>, %arg2: memref<32x1xf32, #tpu.memory_space<vmem>>, %arg3: memref<32x1xf32, #tpu.memory_space<vmem>>, %arg4: memref<96x32xbf16, #tpu.memory_space<vmem>>, %arg5: memref<96x1xf32, #tpu.memory_space<vmem>>, %arg6: memref<32x32xbf16, #tpu.memory_space<vmem>>, %arg7: memref<32x1xf32, #tpu.memory_space<vmem>>, %arg8: memref<32x1xf32, #tpu.memory_space<vmem>>, %arg9: memref<32x1xf32, #tpu.memory_space<vmem>>, %arg10: memref<32x32xbf16, #tpu.memory_space<vmem>>, %arg11: memref<32x1xf32, #tpu.memory_space<vmem>>, %arg12: memref<32x32xbf16, #tpu.memory_space<vmem>>, %arg13: memref<32x1xf32, #tpu.memory_space<vmem>>, %arg14: memref<1x32x128xf32, #tpu.memory_space<vmem>>, %arg15: memref<32x128xbf16, #tpu.memory_space<vmem>>) attributes {dimension_semantics = [#tpu.dimension_semantics<parallel>], iteration_bounds = array<i64: 1>, scalar_prefetch = 0 : i64, scratch_operands = 1 : i64, tpu.core_type = #tpu.core_type<tc>, window_params = [{transform_indices = @transform_0, window_bounds = array<i64: 1, 32, 128>}, {pipeline_mode = #tpu.pipeline_mode<synchronous>, transform_indices = @transform_1, window_bounds = array<i64: 32, 1>}, {pipeline_mode = #tpu.pipeline_mode<synchronous>, transform_indices = @transform_2, window_bounds = array<i64: 32, 1>}, {pipeline_mode = #tpu.pipeline_mode<synchronous>, transform_indices = @transform_3, window_bounds = array<i64: 96, 32>}, {pipeline_mode = #tpu.pipeline_mode<synchronous>, transform_indices = @transform_4, window_bounds = array<i64: 96, 1>}, {pipeline_mode = #tpu.pipeline_mode<synchronous>, transform_indices = @transform_5, window_bounds = array<i64: 32, 32>}, {pipeline_mode = #tpu.pipeline_mode<synchronous>, transform_indices = @transform_6, window_bounds = array<i64: 32, 1>}, {pipeline_mode = #tpu.pipeline_mode<synchronous>, transform_indices = @transform_7, window_bounds = array<i64: 32, 1>}, {pipeline_mode = #tpu.pipeline_mode<synchronous>, transform_indices = @transform_8, window_bounds = array<i64: 32, 1>}, {pipeline_mode = #tpu.pipeline_mode<synchronous>, transform_indices = @transform_9, window_bounds = array<i64: 32, 32>}, {pipeline_mode = #tpu.pipeline_mode<synchronous>, transform_indices = @transform_10, window_bounds = array<i64: 32, 1>}, {pipeline_mode = #tpu.pipeline_mode<synchronous>, transform_indices = @transform_11, window_bounds = array<i64: 32, 32>}, {pipeline_mode = #tpu.pipeline_mode<synchronous>, transform_indices = @transform_12, window_bounds = array<i64: 32, 1>}, {transform_indices = @transform_13, window_bounds = array<i64: 1, 32, 128>}]} {
    %c0 = arith.constant 0 : index
    %c0_0 = arith.constant 0 : index
    %c0_1 = arith.constant 0 : index
    %0 = vector.load %arg1[%c0, %c0_0, %c0_1] : memref<1x32x128xf32, #tpu.memory_space<vmem>>, vector<1x32x128xf32>
    %1 = vector.shape_cast %0 : vector<1x32x128xf32> to vector<32x128xf32>
    %c0_2 = arith.constant 0 : index
    %c0_3 = arith.constant 0 : index
    %2 = vector.load %arg2[%c0_2, %c0_3] : memref<32x1xf32, #tpu.memory_space<vmem>>, vector<32x1xf32>
    %c0_4 = arith.constant 0 : index
    %c0_5 = arith.constant 0 : index
    %3 = vector.load %arg3[%c0_4, %c0_5] : memref<32x1xf32, #tpu.memory_space<vmem>>, vector<32x1xf32>
    %cst = arith.constant dense<0.000000e+00> : vector<128xf32>
    %4 = vector.multi_reduction <add>, %1, %cst [0] : vector<32x128xf32> to vector<128xf32>
    %5 = vector.shape_cast %4 : vector<128xf32> to vector<1x128xf32>
    %cst_6 = arith.constant 3.125000e-02 : f32
    %6 = vector.broadcast %cst_6 : f32 to vector<1x128xf32>
    %7 = arith.mulf %5, %6 : vector<1x128xf32>
    %8 = vector.broadcast %7 : vector<1x128xf32> to vector<32x128xf32>
    %9 = arith.subf %1, %8 : vector<32x128xf32>
    %10 = arith.mulf %9, %9 : vector<32x128xf32>
    %cst_7 = arith.constant dense<0.000000e+00> : vector<128xf32>
    %11 = vector.multi_reduction <add>, %10, %cst_7 [0] : vector<32x128xf32> to vector<128xf32>
    %12 = vector.shape_cast %11 : vector<128xf32> to vector<1x128xf32>
    %cst_8 = arith.constant 3.125000e-02 : f32
    %13 = vector.broadcast %cst_8 : f32 to vector<1x128xf32>
    %14 = arith.mulf %12, %13 : vector<1x128xf32>
    %cst_9 = arith.constant 9.99999974E-6 : f32
    %15 = vector.broadcast %cst_9 : f32 to vector<1x128xf32>
    %16 = arith.addf %14, %15 : vector<1x128xf32>
    %17 = math.rsqrt %16 : vector<1x128xf32>
    %18 = vector.broadcast %17 : vector<1x128xf32> to vector<32x128xf32>
    %19 = arith.mulf %9, %18 : vector<32x128xf32>
    %20 = vector.broadcast %2 : vector<32x1xf32> to vector<32x128xf32>
    %21 = arith.mulf %19, %20 : vector<32x128xf32>
    %22 = vector.broadcast %3 : vector<32x1xf32> to vector<32x128xf32>
    %23 = arith.addf %21, %22 : vector<32x128xf32>
    %c0_10 = arith.constant 0 : index
    %c0_11 = arith.constant 0 : index
    %24 = vector.load %arg4[%c0_10, %c0_11] : memref<96x32xbf16, #tpu.memory_space<vmem>>, vector<96x32xbf16>
    %25 = arith.truncf %23 : vector<32x128xf32> to vector<32x128xbf16>
    %cst_12 = arith.constant dense<0.000000e+00> : vector<96x128xf32>
    %26 = tpu.matmul %24, %25, %cst_12 {dimension_numbers = #tpu.dot_dimension_numbers<[1], [0], [0], [1], [0, 0, 1, 1], [], []>} : vector<96x32xbf16>, vector<32x128xbf16>, vector<96x128xf32> -> vector<96x128xf32>
    %c0_13 = arith.constant 0 : index
    %c0_14 = arith.constant 0 : index
    %27 = vector.load %arg5[%c0_13, %c0_14] : memref<96x1xf32, #tpu.memory_space<vmem>>, vector<96x1xf32>
    %28 = vector.broadcast %27 : vector<96x1xf32> to vector<96x128xf32>
    %29 = arith.addf %26, %28 : vector<96x128xf32>
    %30 = vector.extract_strided_slice %29 {offsets = [0, 0], sizes = [32, 128], strides = [1, 1]} : vector<96x128xf32> to vector<32x128xf32>
    %31 = vector.extract_strided_slice %29 {offsets = [32, 0], sizes = [32, 128], strides = [1, 1]} : vector<96x128xf32> to vector<32x128xf32>
    %32 = vector.extract_strided_slice %29 {offsets = [64, 0], sizes = [32, 128], strides = [1, 1]} : vector<96x128xf32> to vector<32x128xf32>
    %33 = vector.extract_strided_slice %30 {offsets = [0, 0], sizes = [32, 64], strides = [1, 1]} : vector<32x128xf32> to vector<32x64xf32>
    %34 = vector.shape_cast %33 : vector<32x64xf32> to vector<4x8x64xf32>
    %35 = arith.truncf %34 : vector<4x8x64xf32> to vector<4x8x64xbf16>
    %36 = vector.extract_strided_slice %31 {offsets = [0, 0], sizes = [32, 64], strides = [1, 1]} : vector<32x128xf32> to vector<32x64xf32>
    %37 = vector.shape_cast %36 : vector<32x64xf32> to vector<4x8x64xf32>
    %38 = arith.truncf %37 : vector<4x8x64xf32> to vector<4x8x64xbf16>
    %39 = vector.extract_strided_slice %32 {offsets = [0, 0], sizes = [32, 64], strides = [1, 1]} : vector<32x128xf32> to vector<32x64xf32>
    %40 = vector.shape_cast %39 : vector<32x64xf32> to vector<4x8x64xf32>
    %41 = arith.truncf %40 : vector<4x8x64xf32> to vector<4x8x64xbf16>
    "tpu.trace_start"() <{level = 10 : i32, message = "hdq,hdk->hqk"}> : () -> ()
    %cst_15 = arith.constant dense<0.000000e+00> : vector<4x64x64xf32>
    %42 = tpu.matmul %35, %38, %cst_15 {dimension_numbers = #tpu.dot_dimension_numbers<[1], [1], [2], [2], [0, 0, 0, 2, 1, 2], [0], [0]>} : vector<4x8x64xbf16>, vector<4x8x64xbf16>, vector<4x64x64xf32> -> vector<4x64x64xf32>
    "tpu.trace_stop"() : () -> ()
    %cst_16 = arith.constant 0.353553385 : f32
    %43 = vector.broadcast %cst_16 : f32 to vector<4x64x64xf32>
    %44 = arith.mulf %42, %43 : vector<4x64x64xf32>
    %cst_17 = arith.constant dense<0xFF800000> : vector<4x64xf32>
    %45 = vector.multi_reduction <maximumf>, %44, %cst_17 [2] : vector<4x64x64xf32> to vector<4x64xf32>
    %46 = vector.shape_cast %45 : vector<4x64xf32> to vector<4x64x1xf32>
    %47 = vector.broadcast %46 : vector<4x64x1xf32> to vector<4x64x64xf32>
    %48 = arith.subf %44, %47 : vector<4x64x64xf32>
    %49 = math.exp %48 : vector<4x64x64xf32>
    %cst_18 = arith.constant dense<0.000000e+00> : vector<4x64xf32>
    %50 = vector.multi_reduction <add>, %49, %cst_18 [2] : vector<4x64x64xf32> to vector<4x64xf32>
    %51 = vector.shape_cast %50 : vector<4x64xf32> to vector<4x64x1xf32>
    %52 = tpu.reciprocal %51 {approx = true} : vector<4x64x1xf32> -> vector<4x64x1xf32>
    %53 = vector.broadcast %52 : vector<4x64x1xf32> to vector<4x64x64xf32>
    %54 = arith.mulf %49, %53 : vector<4x64x64xf32>
    %55 = arith.truncf %54 : vector<4x64x64xf32> to vector<4x64x64xbf16>
    "tpu.trace_start"() <{level = 10 : i32, message = "hdk,hqk->hdq"}> : () -> ()
    %cst_19 = arith.constant dense<0.000000e+00> : vector<4x8x64xf32>
    %56 = tpu.matmul %41, %55, %cst_19 {dimension_numbers = #tpu.dot_dimension_numbers<[2], [2], [1], [1], [0, 0, 0, 1, 1, 1], [0], [0]>} : vector<4x8x64xbf16>, vector<4x64x64xbf16>, vector<4x8x64xf32> -> vector<4x8x64xf32>
    "tpu.trace_stop"() : () -> ()
    %57 = vector.shape_cast %56 : vector<4x8x64xf32> to vector<32x64xf32>
    %58 = arith.truncf %57 : vector<32x64xf32> to vector<32x64xbf16>
    %c0_20 = arith.constant 0 : index
    %c0_21 = arith.constant 0 : index
    %59 = vector.load %arg15[%c0_20, %c0_21] : memref<32x128xbf16, #tpu.memory_space<vmem>>, vector<32x64xbf16>
    tpu.vector_store %arg15[%c0_20, %c0_21], %58 {strides = array<i32>} : memref<32x128xbf16, #tpu.memory_space<vmem>>, vector<32x64xbf16>,
    %60 = vector.extract_strided_slice %30 {offsets = [0, 64], sizes = [32, 64], strides = [1, 1]} : vector<32x128xf32> to vector<32x64xf32>
    %61 = vector.shape_cast %60 : vector<32x64xf32> to vector<4x8x64xf32>
    %62 = arith.truncf %61 : vector<4x8x64xf32> to vector<4x8x64xbf16>
    %63 = vector.extract_strided_slice %31 {offsets = [0, 64], sizes = [32, 64], strides = [1, 1]} : vector<32x128xf32> to vector<32x64xf32>
    %64 = vector.shape_cast %63 : vector<32x64xf32> to vector<4x8x64xf32>
    %65 = arith.truncf %64 : vector<4x8x64xf32> to vector<4x8x64xbf16>
    %66 = vector.extract_strided_slice %32 {offsets = [0, 64], sizes = [32, 64], strides = [1, 1]} : vector<32x128xf32> to vector<32x64xf32>
    %67 = vector.shape_cast %66 : vector<32x64xf32> to vector<4x8x64xf32>
    %68 = arith.truncf %67 : vector<4x8x64xf32> to vector<4x8x64xbf16>
    "tpu.trace_start"() <{level = 10 : i32, message = "hdq,hdk->hqk"}> : () -> ()
    %cst_22 = arith.constant dense<0.000000e+00> : vector<4x64x64xf32>
    %69 = tpu.matmul %62, %65, %cst_22 {dimension_numbers = #tpu.dot_dimension_numbers<[1], [1], [2], [2], [0, 0, 0, 2, 1, 2], [0], [0]>} : vector<4x8x64xbf16>, vector<4x8x64xbf16>, vector<4x64x64xf32> -> vector<4x64x64xf32>
    "tpu.trace_stop"() : () -> ()
    %cst_23 = arith.constant 0.353553385 : f32
    %70 = vector.broadcast %cst_23 : f32 to vector<4x64x64xf32>
    %71 = arith.mulf %69, %70 : vector<4x64x64xf32>
    %cst_24 = arith.constant dense<0xFF800000> : vector<4x64xf32>
    %72 = vector.multi_reduction <maximumf>, %71, %cst_24 [2] : vector<4x64x64xf32> to vector<4x64xf32>
    %73 = vector.shape_cast %72 : vector<4x64xf32> to vector<4x64x1xf32>
    %74 = vector.broadcast %73 : vector<4x64x1xf32> to vector<4x64x64xf32>
    %75 = arith.subf %71, %74 : vector<4x64x64xf32>
    %76 = math.exp %75 : vector<4x64x64xf32>
    %cst_25 = arith.constant dense<0.000000e+00> : vector<4x64xf32>
    %77 = vector.multi_reduction <add>, %76, %cst_25 [2] : vector<4x64x64xf32> to vector<4x64xf32>
    %78 = vector.shape_cast %77 : vector<4x64xf32> to vector<4x64x1xf32>
    %79 = tpu.reciprocal %78 {approx = true} : vector<4x64x1xf32> -> vector<4x64x1xf32>
    %80 = vector.broadcast %79 : vector<4x64x1xf32> to vector<4x64x64xf32>
    %81 = arith.mulf %76, %80 : vector<4x64x64xf32>
    %82 = arith.truncf %81 : vector<4x64x64xf32> to vector<4x64x64xbf16>
    "tpu.trace_start"() <{level = 10 : i32, message = "hdk,hqk->hdq"}> : () -> ()
    %cst_26 = arith.constant dense<0.000000e+00> : vector<4x8x64xf32>
    %83 = tpu.matmul %68, %82, %cst_26 {dimension_numbers = #tpu.dot_dimension_numbers<[2], [2], [1], [1], [0, 0, 0, 1, 1, 1], [0], [0]>} : vector<4x8x64xbf16>, vector<4x64x64xbf16>, vector<4x8x64xf32> -> vector<4x8x64xf32>
    "tpu.trace_stop"() : () -> ()
    %84 = vector.shape_cast %83 : vector<4x8x64xf32> to vector<32x64xf32>
    %85 = arith.truncf %84 : vector<32x64xf32> to vector<32x64xbf16>
    %c0_27 = arith.constant 0 : index
    %c64 = arith.constant 64 : index
    %86 = vector.load %arg15[%c0_27, %c64] : memref<32x128xbf16, #tpu.memory_space<vmem>>, vector<32x64xbf16>
    tpu.vector_store %arg15[%c0_27, %c64], %85 {strides = array<i32>} : memref<32x128xbf16, #tpu.memory_space<vmem>>, vector<32x64xbf16>,
    %c0_28 = arith.constant 0 : index
    %c0_29 = arith.constant 0 : index
    %87 = vector.load %arg6[%c0_28, %c0_29] : memref<32x32xbf16, #tpu.memory_space<vmem>>, vector<32x32xbf16>
    %c0_30 = arith.constant 0 : index
    %c0_31 = arith.constant 0 : index
    %88 = vector.load %arg15[%c0_30, %c0_31] : memref<32x128xbf16, #tpu.memory_space<vmem>>, vector<32x128xbf16>
    %cst_32 = arith.constant dense<0.000000e+00> : vector<32x128xf32>
    %89 = tpu.matmul %87, %88, %cst_32 {dimension_numbers = #tpu.dot_dimension_numbers<[1], [0], [0], [1], [0, 0, 1, 1], [], []>} : vector<32x32xbf16>, vector<32x128xbf16>, vector<32x128xf32> -> vector<32x128xf32>
    %c0_33 = arith.constant 0 : index
    %c0_34 = arith.constant 0 : index
    %90 = vector.load %arg7[%c0_33, %c0_34] : memref<32x1xf32, #tpu.memory_space<vmem>>, vector<32x1xf32>
    %91 = vector.broadcast %90 : vector<32x1xf32> to vector<32x128xf32>
    %92 = arith.addf %89, %91 : vector<32x128xf32>
    %93 = arith.addf %1, %92 : vector<32x128xf32>
    %c0_35 = arith.constant 0 : index
    %c0_36 = arith.constant 0 : index
    %94 = vector.load %arg8[%c0_35, %c0_36] : memref<32x1xf32, #tpu.memory_space<vmem>>, vector<32x1xf32>
    %c0_37 = arith.constant 0 : index
    %c0_38 = arith.constant 0 : index
    %95 = vector.load %arg9[%c0_37, %c0_38] : memref<32x1xf32, #tpu.memory_space<vmem>>, vector<32x1xf32>
    %cst_39 = arith.constant dense<0.000000e+00> : vector<128xf32>
    %96 = vector.multi_reduction <add>, %93, %cst_39 [0] : vector<32x128xf32> to vector<128xf32>
    %97 = vector.shape_cast %96 : vector<128xf32> to vector<1x128xf32>
    %cst_40 = arith.constant 3.125000e-02 : f32
    %98 = vector.broadcast %cst_40 : f32 to vector<1x128xf32>
    %99 = arith.mulf %97, %98 : vector<1x128xf32>
    %100 = vector.broadcast %99 : vector<1x128xf32> to vector<32x128xf32>
    %101 = arith.subf %93, %100 : vector<32x128xf32>
    %102 = arith.mulf %101, %101 : vector<32x128xf32>
    %cst_41 = arith.constant dense<0.000000e+00> : vector<128xf32>
    %103 = vector.multi_reduction <add>, %102, %cst_41 [0] : vector<32x128xf32> to vector<128xf32>
    %104 = vector.shape_cast %103 : vector<128xf32> to vector<1x128xf32>
    %cst_42 = arith.constant 3.125000e-02 : f32
    %105 = vector.broadcast %cst_42 : f32 to vector<1x128xf32>
    %106 = arith.mulf %104, %105 : vector<1x128xf32>
    %cst_43 = arith.constant 9.99999974E-6 : f32
    %107 = vector.broadcast %cst_43 : f32 to vector<1x128xf32>
    %108 = arith.addf %106, %107 : vector<1x128xf32>
    %109 = math.rsqrt %108 : vector<1x128xf32>
    %110 = vector.broadcast %109 : vector<1x128xf32> to vector<32x128xf32>
    %111 = arith.mulf %101, %110 : vector<32x128xf32>
    %112 = vector.broadcast %94 : vector<32x1xf32> to vector<32x128xf32>
    %113 = arith.mulf %111, %112 : vector<32x128xf32>
    %114 = vector.broadcast %95 : vector<32x1xf32> to vector<32x128xf32>
    %115 = arith.addf %113, %114 : vector<32x128xf32>
    %c0_44 = arith.constant 0 : index
    %c0_45 = arith.constant 0 : index
    %116 = vector.load %arg10[%c0_44, %c0_45] : memref<32x32xbf16, #tpu.memory_space<vmem>>, vector<32x32xbf16>
    %117 = arith.truncf %115 : vector<32x128xf32> to vector<32x128xbf16>
    %cst_46 = arith.constant dense<0.000000e+00> : vector<32x128xf32>
    %118 = tpu.matmul %116, %117, %cst_46 {dimension_numbers = #tpu.dot_dimension_numbers<[1], [0], [0], [1], [0, 0, 1, 1], [], []>} : vector<32x32xbf16>, vector<32x128xbf16>, vector<32x128xf32> -> vector<32x128xf32>
    %c0_47 = arith.constant 0 : index
    %c0_48 = arith.constant 0 : index
    %119 = vector.load %arg11[%c0_47, %c0_48] : memref<32x1xf32, #tpu.memory_space<vmem>>, vector<32x1xf32>
    %120 = vector.broadcast %119 : vector<32x1xf32> to vector<32x128xf32>
    %121 = arith.addf %118, %120 : vector<32x128xf32>
    %cst_49 = arith.constant 5.000000e-01 : f32
    %122 = vector.broadcast %cst_49 : f32 to vector<32x128xf32>
    %123 = arith.mulf %122, %121 : vector<32x128xf32>
    %cst_50 = arith.constant 0.707106769 : f32
    %124 = vector.broadcast %cst_50 : f32 to vector<32x128xf32>
    %125 = arith.mulf %121, %124 : vector<32x128xf32>
    %126 = math.erf %125 : vector<32x128xf32>
    %cst_51 = arith.constant 1.000000e+00 : f32
    %127 = vector.broadcast %cst_51 : f32 to vector<32x128xf32>
    %128 = arith.addf %127, %126 : vector<32x128xf32>
    %129 = arith.mulf %123, %128 : vector<32x128xf32>
    %c0_52 = arith.constant 0 : index
    %c0_53 = arith.constant 0 : index
    %130 = vector.load %arg12[%c0_52, %c0_53] : memref<32x32xbf16, #tpu.memory_space<vmem>>, vector<32x32xbf16>
    %131 = arith.truncf %129 : vector<32x128xf32> to vector<32x128xbf16>
    %cst_54 = arith.constant dense<0.000000e+00> : vector<32x128xf32>
    %132 = tpu.matmul %130, %131, %cst_54 {dimension_numbers = #tpu.dot_dimension_numbers<[1], [0], [0], [1], [0, 0, 1, 1], [], []>} : vector<32x32xbf16>, vector<32x128xbf16>, vector<32x128xf32> -> vector<32x128xf32>
    %c0_55 = arith.constant 0 : index
    %c0_56 = arith.constant 0 : index
    %133 = vector.load %arg13[%c0_55, %c0_56] : memref<32x1xf32, #tpu.memory_space<vmem>>, vector<32x1xf32>
    %134 = vector.broadcast %133 : vector<32x1xf32> to vector<32x128xf32>
    %135 = arith.addf %132, %134 : vector<32x128xf32>
    %136 = arith.addf %93, %135 : vector<32x128xf32>
    %c0_57 = arith.constant 0 : index
    %c0_58 = arith.constant 0 : index
    %c0_59 = arith.constant 0 : index
    %137 = vector.load %arg14[%c0_57, %c0_58, %c0_59] : memref<1x32x128xf32, #tpu.memory_space<vmem>>, vector<1x32x128xf32>
    %138 = vector.shape_cast %137 : vector<1x32x128xf32> to vector<32x128xf32>
    %139 = vector.shape_cast %136 : vector<32x128xf32> to vector<1x32x128xf32>
    tpu.vector_store %arg14[%c0_57, %c0_58, %c0_59], %139 {strides = array<i32>} : memref<1x32x128xf32, #tpu.memory_space<vmem>>, vector<1x32x128xf32>,
    return
  }
  func.func @transform_0(%arg0: i32) -> (i32, i32, i32) {
    %c0_i32 = arith.constant 0 : i32
    %c0_i32_0 = arith.constant 0 : i32
    %c0_i32_1 = arith.constant 0 : i32
    return %arg0, %c0_i32, %c0_i32_0 : i32, i32, i32
  }
  func.func @transform_1(%arg0: i32) -> (i32, i32) {
    %c0_i32 = arith.constant 0 : i32
    %c0_i32_0 = arith.constant 0 : i32
    %c0_i32_1 = arith.constant 0 : i32
    return %c0_i32, %c0_i32_0 : i32, i32
  }
  func.func @transform_2(%arg0: i32) -> (i32, i32) {
    %c0_i32 = arith.constant 0 : i32
    %c0_i32_0 = arith.constant 0 : i32
    %c0_i32_1 = arith.constant 0 : i32
    return %c0_i32, %c0_i32_0 : i32, i32
  }
  func.func @transform_3(%arg0: i32) -> (i32, i32) {
    %c0_i32 = arith.constant 0 : i32
    %c0_i32_0 = arith.constant 0 : i32
    %c0_i32_1 = arith.constant 0 : i32
    return %c0_i32, %c0_i32_0 : i32, i32
  }
  func.func @transform_4(%arg0: i32) -> (i32, i32) {
    %c0_i32 = arith.constant 0 : i32
    %c0_i32_0 = arith.constant 0 : i32
    %c0_i32_1 = arith.constant 0 : i32
    return %c0_i32, %c0_i32_0 : i32, i32
  }
  func.func @transform_5(%arg0: i32) -> (i32, i32) {
    %c0_i32 = arith.constant 0 : i32
    %c0_i32_0 = arith.constant 0 : i32
    %c0_i32_1 = arith.constant 0 : i32
    return %c0_i32, %c0_i32_0 : i32, i32
  }
  func.func @transform_6(%arg0: i32) -> (i32, i32) {
    %c0_i32 = arith.constant 0 : i32
    %c0_i32_0 = arith.constant 0 : i32
    %c0_i32_1 = arith.constant 0 : i32
    return %c0_i32, %c0_i32_0 : i32, i32
  }
  func.func @transform_7(%arg0: i32) -> (i32, i32) {
    %c0_i32 = arith.constant 0 : i32
    %c0_i32_0 = arith.constant 0 : i32
    %c0_i32_1 = arith.constant 0 : i32
    return %c0_i32, %c0_i32_0 : i32, i32
  }
  func.func @transform_8(%arg0: i32) -> (i32, i32) {
    %c0_i32 = arith.constant 0 : i32
    %c0_i32_0 = arith.constant 0 : i32
    %c0_i32_1 = arith.constant 0 : i32
    return %c0_i32, %c0_i32_0 : i32, i32
  }
  func.func @transform_9(%arg0: i32) -> (i32, i32) {
    %c0_i32 = arith.constant 0 : i32
    %c0_i32_0 = arith.constant 0 : i32
    %c0_i32_1 = arith.constant 0 : i32
    return %c0_i32, %c0_i32_0 : i32, i32
  }
  func.func @transform_10(%arg0: i32) -> (i32, i32) {
    %c0_i32 = arith.constant 0 : i32
    %c0_i32_0 = arith.constant 0 : i32
    %c0_i32_1 = arith.constant 0 : i32
    return %c0_i32, %c0_i32_0 : i32, i32
  }
  func.func @transform_11(%arg0: i32) -> (i32, i32) {
    %c0_i32 = arith.constant 0 : i32
    %c0_i32_0 = arith.constant 0 : i32
    %c0_i32_1 = arith.constant 0 : i32
    return %c0_i32, %c0_i32_0 : i32, i32
  }
  func.func @transform_12(%arg0: i32) -> (i32, i32) {
    %c0_i32 = arith.constant 0 : i32
    %c0_i32_0 = arith.constant 0 : i32
    %c0_i32_1 = arith.constant 0 : i32
    return %c0_i32, %c0_i32_0 : i32, i32
  }
  func.func @transform_13(%arg0: i32) -> (i32, i32, i32) {
    %c0_i32 = arith.constant 0 : i32
    %c0_i32_0 = arith.constant 0 : i32
    %c0_i32_1 = arith.constant 0 : i32
    return %arg0, %c0_i32, %c0_i32_0 : i32, i32, i32
  }
}

</mosaic_0001>

<llo_original>
// kernel: tpu_custom_call.1
$region0: #{tpu_custom_call.1}
  #allocation0 [shape = 'u32[]', space=smem, size = 0x4, offset = 0x4, fixed_abs, tag = 'smem constant byte address 0x4 - core index']
  #allocation1 [shape = 'u32[72,128]{1,0:T(1,128)}', space=vmem, size = 0x9000, scoped, tag = 'internal scratch']
  #allocation2 [shape = 'bf16[32,128]{1,0:T(8,128)(2,1)}', space=vmem, size = 0x2000, scoped, tag = 'scratch operand']
  %s0 = inlined_call_operand.vmem [shape: f32[1,32,128], index: 0, kind: input, shape index: {}]
  %s1 = inlined_call_operand.vmem [shape: f32[32,1], index: 1, kind: input, shape index: {}]
  %s2 = inlined_call_operand.vmem [shape: f32[32,1], index: 2, kind: input, shape index: {}]
  %s3 = inlined_call_operand.vmem [shape: bf16[96,32], index: 3, kind: input, shape index: {}]
  %s4 = inlined_call_operand.vmem [shape: f32[96,1], index: 4, kind: input, shape index: {}]
  %s5 = inlined_call_operand.vmem [shape: bf16[32,32], index: 5, kind: input, shape index: {}]
  %s6 = inlined_call_operand.vmem [shape: f32[32,1], index: 6, kind: input, shape index: {}]
  %s7 = inlined_call_operand.vmem [shape: f32[32,1], index: 7, kind: input, shape index: {}]
  %s8 = inlined_call_operand.vmem [shape: f32[32,1], index: 8, kind: input, shape index: {}]
  %s9 = inlined_call_operand.vmem [shape: bf16[32,32], index: 9, kind: input, shape index: {}]
  %s10 = inlined_call_operand.vmem [shape: f32[32,1], index: 10, kind: input, shape index: {}]
  %s11 = inlined_call_operand.vmem [shape: bf16[32,32], index: 11, kind: input, shape index: {}]
  %s12 = inlined_call_operand.vmem [shape: f32[32,1], index: 12, kind: input, shape index: {}]
  %s13 = inlined_call_operand.hbm [shape: f32[1,32,128], index: 13, kind: output, shape index: {}]
  %s14 = sld [smem:[#allocation0]]
  $region62: #{tpu_custom_call.1} parent=0
    _
  %s16 = ssub.s32 1, %s14
  %s17 = scalar_select 0, %s16, %s14
  $region1: #{tpu_custom_call.1} parent=0
    #allocation3 [shape = 'u8[16384]{0}', space=vmem, size = 0x4000, scoped, tag = 'output window, operand 0, single buffered']
    #allocation4 [shape = 's32[1]{0}', space=sflag, size = 0x4, scoped, tag = 'scoped memory for tpu_custom_call.1']
    %18 = vsyncpa [#allocation4], 0
    // Predicated region
    $region2: #{tpu_custom_call.1} parent=1 // pred_check
      _
    $region3: #{tpu_custom_call.1} parent=1 // pred_check_branch
      %20 = sbr.rel (0) target = $region5
    $region4: #{tpu_custom_call.1} parent=1 // pred_region
      _
    $region5: #{tpu_custom_call.1} parent=1 // pred_fallthru
      _
    // Predicated region
    $region6: #{tpu_custom_call.1} parent=1 // pred_check
      _
    $region7: #{tpu_custom_call.1} parent=1 // pred_check_branch
      %22 = sbr.rel (0) target = $region9
    $region8: #{tpu_custom_call.1} parent=1 // pred_region
      _
    $region9: #{tpu_custom_call.1} parent=1 // pred_fallthru
      _
    // Predicated region
    $region10: #{tpu_custom_call.1} parent=1 // pred_check
      _
    $region11: #{tpu_custom_call.1} parent=1 // pred_check_branch
      %24 = sbr.rel (0) target = $region13
    $region12: #{tpu_custom_call.1} parent=1 // pred_region
      _
    $region13: #{tpu_custom_call.1} parent=1 // pred_fallthru
      _
    // Predicated region
    $region14: #{tpu_custom_call.1} parent=1 // pred_check
      _
    $region15: #{tpu_custom_call.1} parent=1 // pred_check_branch
      %26 = sbr.rel (0) target = $region17
    $region16: #{tpu_custom_call.1} parent=1 // pred_region
      _
    $region17: #{tpu_custom_call.1} parent=1 // pred_fallthru
      _
    // Predicated region
    $region18: #{tpu_custom_call.1} parent=1 // pred_check
      _
    $region19: #{tpu_custom_call.1} parent=1 // pred_check_branch
      %28 = sbr.rel (0) target = $region21
    $region20: #{tpu_custom_call.1} parent=1 // pred_region
      _
    $region21: #{tpu_custom_call.1} parent=1 // pred_fallthru
      _
    // Predicated region
    $region22: #{tpu_custom_call.1} parent=1 // pred_check
      _
    $region23: #{tpu_custom_call.1} parent=1 // pred_check_branch
      %30 = sbr.rel (0) target = $region25
    $region24: #{tpu_custom_call.1} parent=1 // pred_region
      _
    $region25: #{tpu_custom_call.1} parent=1 // pred_fallthru
      _
    // Predicated region
    $region26: #{tpu_custom_call.1} parent=1 // pred_check
      _
    $region27: #{tpu_custom_call.1} parent=1 // pred_check_branch
      %32 = sbr.rel (0) target = $region29
    $region28: #{tpu_custom_call.1} parent=1 // pred_region
      _
    $region29: #{tpu_custom_call.1} parent=1 // pred_fallthru
      _
    // Predicated region
    $region30: #{tpu_custom_call.1} parent=1 // pred_check
      _
    $region31: #{tpu_custom_call.1} parent=1 // pred_check_branch
      %34 = sbr.rel (0) target = $region33
    $region32: #{tpu_custom_call.1} parent=1 // pred_region
      _
    $region33: #{tpu_custom_call.1} parent=1 // pred_fallthru
      _
    // Predicated region
    $region34: #{tpu_custom_call.1} parent=1 // pred_check
      _
    $region35: #{tpu_custom_call.1} parent=1 // pred_check_branch
      %36 = sbr.rel (0) target = $region37
    $region36: #{tpu_custom_call.1} parent=1 // pred_region
      _
    $region37: #{tpu_custom_call.1} parent=1 // pred_fallthru
      _
    // Predicated region
    $region38: #{tpu_custom_call.1} parent=1 // pred_check
      _
    $region39: #{tpu_custom_call.1} parent=1 // pred_check_branch
      %38 = sbr.rel (0) target = $region41
    $region40: #{tpu_custom_call.1} parent=1 // pred_region
      _
    $region41: #{tpu_custom_call.1} parent=1 // pred_fallthru
      _
    // Predicated region
    $region42: #{tpu_custom_call.1} parent=1 // pred_check
      _
    $region43: #{tpu_custom_call.1} parent=1 // pred_check_branch
      %40 = sbr.rel (0) target = $region45
    $region44: #{tpu_custom_call.1} parent=1 // pred_region
      _
    $region45: #{tpu_custom_call.1} parent=1 // pred_fallthru
      _
    // Predicated region
    $region46: #{tpu_custom_call.1} parent=1 // pred_check
      _
    $region47: #{tpu_custom_call.1} parent=1 // pred_check_branch
      %42 = sbr.rel (0) target = $region49
    $region48: #{tpu_custom_call.1} parent=1 // pred_region
      _
    $region49: #{tpu_custom_call.1} parent=1 // pred_fallthru
      _
    // Predicated region
    $region50: #{tpu_custom_call.1} parent=1 // pred_check
      _
    $region51: #{tpu_custom_call.1} parent=1 // pred_check_branch
      %44 = sbr.rel (0) target = $region53
    $region52: #{tpu_custom_call.1} parent=1 // pred_region
      _
    $region53: #{tpu_custom_call.1} parent=1 // pred_fallthru
      _
    %v46 = vld [vmem:[%s0] sm:$0xff]
    %v47 = vld [vmem:[%s0 + $0x8] sm:$0xff]
    %v48 = vld [vmem:[%s0 + $0x10] sm:$0xff]
    %v49 = vld [vmem:[%s0 + $0x18] sm:$0xff]
    %v50 = vld [vmem:[%s1] sm:$0xff]
    %v51 = vld [vmem:[%s1 + $0x8] sm:$0xff]
    %v52 = vld [vmem:[%s1 + $0x10] sm:$0xff]
    %v53 = vld [vmem:[%s1 + $0x18] sm:$0xff]
    %v54 = vld [vmem:[%s2] sm:$0xff]
    %v55 = vld [vmem:[%s2 + $0x8] sm:$0xff]
    %v56 = vld [vmem:[%s2 + $0x10] sm:$0xff]
    %v57 = vld [vmem:[%s2 + $0x18] sm:$0xff]
    %v58 = vadd.f32 %v46, %v47
    %v59 = vadd.f32 %v58, %v48
    %v60 = vadd.f32 %v59, %v49
    %v61 = vrot.slane %v60, 4
    %v62 = vadd.f32 %v60, %v61
    %v63 = vrot.slane %v62, 2
    %v64 = vadd.f32 %v62, %v63
    %v65 = vrot.slane %v64, 1
    %v66 = vadd.f32 %v64, %v65
    %v67 = vmul.f32 %v66, 0.03125
    %v68 = vsub.f32 %v46, %v67
    %v69 = vsub.f32 %v47, %v67
    %v70 = vsub.f32 %v48, %v67
    %v71 = vsub.f32 %v49, %v67
    %v72 = vmul.f32 %v68, %v68
    %v73 = vmul.f32 %v69, %v69
    %v74 = vmul.f32 %v70, %v70
    %v75 = vmul.f32 %v71, %v71
    %v76 = vadd.f32 %v72, %v73
    %v77 = vadd.f32 %v76, %v74
    %v78 = vadd.f32 %v77, %v75
    %v79 = vrot.slane %v78, 4
    %v80 = vadd.f32 %v78, %v79
    %v81 = vrot.slane %v80, 2
    %v82 = vadd.f32 %v80, %v81
    %v83 = vrot.slane %v82, 1
    %v84 = vadd.f32 %v82, %v83
    %v85 = vmul.f32 %v84, 0.03125
    %v86 = vadd.f32 %v85, 1e-05
    %v87 = vrsqrt.pop %v86
    %v88 = vmul.f32 %v87, %v86
    %v89 = vmul.f32 %v88, %v87
    %v90 = vmul.f32 0.5, %v89
    %v91 = vsub.f32 1.5, %v90
    %v92 = vmul.f32 %v87, %v91
    %vm93 = vweird.f32 %v86
    %vm94 = vweird.f32 %v87
    %vm95 = vmor %vm93, %vm94
    %v96 = vsel %vm95, %v87, %v92
    %v97 = vmul.f32 %v68, %v96
    %v98 = vmul.f32 %v69, %v96
    %v99 = vmul.f32 %v70, %v96
    %v100 = vmul.f32 %v71, %v96
    %102 = vset.pattern.permute.xlu0 0
    %103 = vperm.xlu0 %102, %v50
    %v104 = vpop.permute.xlu0 %103
    %107 = vset.pattern.permute.xlu0 0
    %108 = vperm.xlu0 %107, %v51
    %v109 = vpop.permute.xlu0 %108
    %112 = vset.pattern.permute.xlu0 0
    %113 = vperm.xlu0 %112, %v52
    %v114 = vpop.permute.xlu0 %113
    %117 = vset.pattern.permute.xlu0 0
    %118 = vperm.xlu0 %117, %v53
    %v119 = vpop.permute.xlu0 %118
    %v121 = vmul.f32 %v97, %v104
    %v122 = vmul.f32 %v98, %v109
    %v123 = vmul.f32 %v99, %v114
    %v124 = vmul.f32 %v100, %v119
    %126 = vset.pattern.permute.xlu0 0
    %127 = vperm.xlu0 %126, %v54
    %v128 = vpop.permute.xlu0 %127
    %131 = vset.pattern.permute.xlu0 0
    %132 = vperm.xlu0 %131, %v55
    %v133 = vpop.permute.xlu0 %132
    %136 = vset.pattern.permute.xlu0 0
    %137 = vperm.xlu0 %136, %v56
    %v138 = vpop.permute.xlu0 %137
    %141 = vset.pattern.permute.xlu0 0
    %142 = vperm.xlu0 %141, %v57
    %v143 = vpop.permute.xlu0 %142
    %v145 = vadd.f32 %v121, %v128
    %v146 = vadd.f32 %v122, %v133
    %v147 = vadd.f32 %v123, %v138
    %v148 = vadd.f32 %v124, %v143
    %v149 = vld [vmem:[%s3] sm:$0xf]
    %v150 = vld [vmem:[%s3 + $0x4] sm:$0xf]
    %v151 = vld [vmem:[%s3 + $0x8] sm:$0xf]
    %v152 = vld [vmem:[%s3 + $0xc] sm:$0xf]
    %v153 = vld [vmem:[%s3 + $0x10] sm:$0xf]
    %v154 = vld [vmem:[%s3 + $0x14] sm:$0xf]
    %v155 = vld [vmem:[%s3 + $0x18] sm:$0xf]
    %v156 = vld [vmem:[%s3 + $0x1c] sm:$0xf]
    %v157 = vld [vmem:[%s3 + $0x20] sm:$0xf]
    %v158 = vld [vmem:[%s3 + $0x24] sm:$0xf]
    %v159 = vld [vmem:[%s3 + $0x28] sm:$0xf]
    %v160 = vld [vmem:[%s3 + $0x2c] sm:$0xf]
    %v161 = vpack.c.bf16 %v146, %v145
    %v162 = vpack.c.bf16 %v148, %v147
    %v163 = vld [vmem:[%s4] sm:$0xff]
    %v164 = vld [vmem:[%s4 + $0x8] sm:$0xff]
    %v165 = vld [vmem:[%s4 + $0x10] sm:$0xff]
    %v166 = vld [vmem:[%s4 + $0x18] sm:$0xff]
    %v167 = vld [vmem:[%s4 + $0x20] sm:$0xff]
    %v168 = vld [vmem:[%s4 + $0x28] sm:$0xff]
    %v169 = vld [vmem:[%s4 + $0x30] sm:$0xff]
    %v170 = vld [vmem:[%s4 + $0x38] sm:$0xff]
    %v171 = vld [vmem:[%s4 + $0x40] sm:$0xff]
    %v172 = vld [vmem:[%s4 + $0x48] sm:$0xff]
    %v173 = vld [vmem:[%s4 + $0x50] sm:$0xff]
    %v174 = vld [vmem:[%s4 + $0x58] sm:$0xff]
    %176 = vset.pattern.permute.xlu0 0
    %177 = vperm.xlu0 %176, %v163
    %v178 = vpop.permute.xlu0 %177
    %181 = vset.pattern.permute.xlu0 0
    %182 = vperm.xlu0 %181, %v164
    %v183 = vpop.permute.xlu0 %182
    %186 = vset.pattern.permute.xlu0 0
    %187 = vperm.xlu0 %186, %v165
    %v188 = vpop.permute.xlu0 %187
    %191 = vset.pattern.permute.xlu0 0
    %192 = vperm.xlu0 %191, %v166
    %v193 = vpop.permute.xlu0 %192
    %196 = vset.pattern.permute.xlu0 0
    %197 = vperm.xlu0 %196, %v167
    %v198 = vpop.permute.xlu0 %197
    %201 = vset.pattern.permute.xlu0 0
    %202 = vperm.xlu0 %201, %v168
    %v203 = vpop.permute.xlu0 %202
    %206 = vset.pattern.permute.xlu0 0
    %207 = vperm.xlu0 %206, %v169
    %v208 = vpop.permute.xlu0 %207
    %211 = vset.pattern.permute.xlu0 0
    %212 = vperm.xlu0 %211, %v170
    %v213 = vpop.permute.xlu0 %212
    %216 = vset.pattern.permute.xlu0 0
    %217 = vperm.xlu0 %216, %v171
    %v218 = vpop.permute.xlu0 %217
    %221 = vset.pattern.permute.xlu0 0
    %222 = vperm.xlu0 %221, %v172
    %v223 = vpop.permute.xlu0 %222
    %226 = vset.pattern.permute.xlu0 0
    %227 = vperm.xlu0 %226, %v173
    %v228 = vpop.permute.xlu0 %227
    %231 = vset.pattern.permute.xlu0 0
    %232 = vperm.xlu0 %231, %v174
    %v233 = vpop.permute.xlu0 %232
    %v247 = vunpack.c.l.b16 %v149
    %v248 = vunpack.c.l.b16 %v150
    %v249 = vunpack.c.l.b16 %v151
    %v250 = vunpack.c.l.b16 %v152
    %v251 = vunpack.c.l.b16 %v153
    %v252 = vunpack.c.l.b16 %v154
    %v253 = vunpack.c.l.b16 %v155
    %v254 = vunpack.c.l.b16 %v156
    %v255 = vunpack.c.l.b16 %v157
    %v256 = vunpack.c.l.b16 %v158
    %v257 = vunpack.c.l.b16 %v159
    %v258 = vunpack.c.l.b16 %v160
    %v259 = vpack.c.b16 %v248, %v247
    %v260 = vpack.c.b16 %v250, %v249
    %v261 = vpack.c.b16 %v252, %v251
    %v262 = vpack.c.b16 %v254, %v253
    %v263 = vpack.c.b16 %v256, %v255
    %v264 = vpack.c.b16 %v258, %v257
    %vm265 = vcmask 261120
    %v267 = vsel %vm265, %v259, 0
    %v270 = vsel %vm265, %v260, 0
    %v273 = vsel %vm265, %v261, 0
    %v276 = vsel %vm265, %v262, 0
    %v279 = vsel %vm265, %v263, 0
    %v282 = vsel %vm265, %v264, 0
    %284 = vmatpush.bf16.msra.mxu0 0
    %285 = vmatpush.bf16.msra.mxu0 0
    %286 = vmatpush.bf16.msra.mxu0 0
    %287 = vmatpush.bf16.msra.mxu0 0
    %288 = vmatpush.bf16.msra.mxu0 0
    %289 = vmatpush.bf16.msra.mxu0 0
    %290 = vmatpush.bf16.msra.mxu0 %v162
    %291 = vmatpush.bf16.msra.mxu0 %v161
    %292 = vmatmul.bf16.gmra.mxu0 %v267
    %v293 = vpop.f32.mrf.mxu0
    %v294 = vadd.f32 %v178, %v293
    %v295 = vpop.f32.mrf.mxu0
    %v296 = vadd.f32 %v183, %v295
    %297 = vmatmul.bf16.gmra.mxu0 %v270
    %v298 = vpop.f32.mrf.mxu0
    %v299 = vadd.f32 %v188, %v298
    %v300 = vpop.f32.mrf.mxu0
    %v301 = vadd.f32 %v193, %v300
    %302 = vmatmul.bf16.gmra.mxu0 %v273
    %v303 = vpop.f32.mrf.mxu0
    %v304 = vadd.f32 %v198, %v303
    %v305 = vpop.f32.mrf.mxu0
    %v306 = vadd.f32 %v203, %v305
    %307 = vmatmul.bf16.gmra.mxu0 %v276
    %v308 = vpop.f32.mrf.mxu0
    %v309 = vadd.f32 %v208, %v308
    %v310 = vpop.f32.mrf.mxu0
    %v311 = vadd.f32 %v213, %v310
    %312 = vmatmul.bf16.gmra.mxu0 %v279
    %v313 = vpop.f32.mrf.mxu0
    %v314 = vadd.f32 %v218, %v313
    %v315 = vpop.f32.mrf.mxu0
    %v316 = vadd.f32 %v223, %v315
    %317 = vmatmul.bf16.gmra.mxu0 %v282
    %v318 = vpop.f32.mrf.mxu0
    %v319 = vadd.f32 %v228, %v318
    %v320 = vpop.f32.mrf.mxu0
    %v321 = vadd.f32 %v233, %v320
    %322 = vdwg.mxu0
    %v323 = vpack.c.bf16 %v294, %v294
    %v324 = vpack.c.bf16 %v296, %v296
    %v325 = vpack.c.bf16 %v299, %v299
    %v326 = vpack.c.bf16 %v301, %v301
    %v327 = vpack.c.bf16 %v304, %v304
    %v328 = vpack.c.bf16 %v306, %v306
    %v329 = vpack.c.bf16 %v309, %v309
    %v330 = vpack.c.bf16 %v311, %v311
    %v331 = vpack.c.bf16 %v314, %v314
    %v332 = vpack.c.bf16 %v316, %v316
    %v333 = vpack.c.bf16 %v319, %v319
    %v334 = vpack.c.bf16 %v321, %v321
    %335 = vxpose.xlu0.c.b16.start [1/8] %v323, 128
    %336 = vxpose.xlu0.c.b16.cont [2/8] 0, 128
    %337 = vxpose.xlu0.c.b16.cont [3/8] 0, 128
    %338 = vxpose.xlu0.c.b16.cont [4/8] 0, 128
    %339 = vxpose.xlu0.c.b16.cont [5/8] 0, 128
    %340 = vxpose.xlu0.c.b16.cont [6/8] 0, 128
    %341 = vxpose.xlu0.c.b16.cont [7/8] 0, 128
    %342 = vxpose.xlu0.c.b16.end [8/8] 0, 128
    %v343 = vpop.trf.xlu0
    %v344 = vpop.trf.xlu0
    %v345 = vpop.trf.xlu0
    %v346 = vpop.trf.xlu0
    %v347 = vpop.trf.xlu0
    %v348 = vpop.trf.xlu0
    %v349 = vpop.trf.xlu0
    %v350 = vpop.trf.xlu0
    %vm351 = vcmask 64512
    %v353 = vsel %vm351, %v343, 0
    %v356 = vsel %vm351, %v344, 0
    %v359 = vsel %vm351, %v345, 0
    %v362 = vsel %vm351, %v346, 0
    %vm364 = vcmask 1043456
    %v366 = vsel %vm364, %v327, 0
    %368 = vmatpush.bf16.msra.mxu0 0
    %369 = vmatpush.bf16.msra.mxu0 0
    %370 = vmatpush.bf16.msra.mxu0 0
    %371 = vmatpush.bf16.msra.mxu0 0
    %372 = vmatpush.bf16.msra.mxu0 0
    %373 = vmatpush.bf16.msra.mxu0 0
    %374 = vmatpush.bf16.msra.mxu0 0
    %375 = vmatpush.bf16.msra.mxu0 %v366
    %376 = vmatmul.bf16.gmra.mxu0 %v353
    %v377 = vpop.f32.mrf.mxu0
    %v378 = vadd.f32 0.0, %v377
    %v379 = vpop.f32.mrf.mxu0
    %v380 = vadd.f32 0.0, %v379
    %381 = vmatmul.bf16.gmra.mxu0 %v356
    %v382 = vpop.f32.mrf.mxu0
    %v383 = vadd.f32 0.0, %v382
    %v384 = vpop.f32.mrf.mxu0
    %v385 = vadd.f32 0.0, %v384
    %386 = vmatmul.bf16.gmra.mxu0 %v359
    %v387 = vpop.f32.mrf.mxu0
    %v388 = vadd.f32 0.0, %v387
    %v389 = vpop.f32.mrf.mxu0
    %v390 = vadd.f32 0.0, %v389
    %391 = vmatmul.bf16.gmra.mxu0 %v362
    %v392 = vpop.f32.mrf.mxu0
    %v393 = vadd.f32 0.0, %v392
    %v394 = vpop.f32.mrf.mxu0
    %v395 = vadd.f32 0.0, %v394
    %396 = vdwg.mxu0
    %397 = vxpose.xlu0.c.b16.start [1/8] %v324, 128
    %398 = vxpose.xlu0.c.b16.cont [2/8] 0, 128
    %399 = vxpose.xlu0.c.b16.cont [3/8] 0, 128
    %400 = vxpose.xlu0.c.b16.cont [4/8] 0, 128
    %401 = vxpose.xlu0.c.b16.cont [5/8] 0, 128
    %402 = vxpose.xlu0.c.b16.cont [6/8] 0, 128
    %403 = vxpose.xlu0.c.b16.cont [7/8] 0, 128
    %404 = vxpose.xlu0.c.b16.end [8/8] 0, 128
    %v405 = vpop.trf.xlu0
    %v406 = vpop.trf.xlu0
    %v407 = vpop.trf.xlu0
    %v408 = vpop.trf.xlu0
    %v409 = vpop.trf.xlu0
    %v410 = vpop.trf.xlu0
    %v411 = vpop.trf.xlu0
    %v412 = vpop.trf.xlu0
    %v414 = vsel %vm351, %v405, 0
    %v417 = vsel %vm351, %v406, 0
    %v420 = vsel %vm351, %v407, 0
    %v423 = vsel %vm351, %v408, 0
    %v426 = vsel %vm364, %v328, 0
    %428 = vmatpush.bf16.msra.mxu0 0
    %429 = vmatpush.bf16.msra.mxu0 0
    %430 = vmatpush.bf16.msra.mxu0 0
    %431 = vmatpush.bf16.msra.mxu0 0
    %432 = vmatpush.bf16.msra.mxu0 0
    %433 = vmatpush.bf16.msra.mxu0 0
    %434 = vmatpush.bf16.msra.mxu0 0
    %435 = vmatpush.bf16.msra.mxu0 %v426
    %436 = vmatmul.bf16.gmra.mxu0 %v414
    %v437 = vpop.f32.mrf.mxu0
    %v438 = vadd.f32 0.0, %v437
    %v439 = vpop.f32.mrf.mxu0
    %v440 = vadd.f32 0.0, %v439
    %441 = vmatmul.bf16.gmra.mxu0 %v417
    %v442 = vpop.f32.mrf.mxu0
    %v443 = vadd.f32 0.0, %v442
    %v444 = vpop.f32.mrf.mxu0
    %v445 = vadd.f32 0.0, %v444
    %446 = vmatmul.bf16.gmra.mxu0 %v420
    %v447 = vpop.f32.mrf.mxu0
    %v448 = vadd.f32 0.0, %v447
    %v449 = vpop.f32.mrf.mxu0
    %v450 = vadd.f32 0.0, %v449
    %451 = vmatmul.bf16.gmra.mxu0 %v423
    %v452 = vpop.f32.mrf.mxu0
    %v453 = vadd.f32 0.0, %v452
    %v454 = vpop.f32.mrf.mxu0
    %v455 = vadd.f32 0.0, %v454
    %456 = vdwg.mxu0
    %457 = vxpose.xlu0.c.b16.start [1/8] %v325, 128
    %458 = vxpose.xlu0.c.b16.cont [2/8] 0, 128
    %459 = vxpose.xlu0.c.b16.cont [3/8] 0, 128
    %460 = vxpose.xlu0.c.b16.cont [4/8] 0, 128
    %461 = vxpose.xlu0.c.b16.cont [5/8] 0, 128
    %462 = vxpose.xlu0.c.b16.cont [6/8] 0, 128
    %463 = vxpose.xlu0.c.b16.cont [7/8] 0, 128
    %464 = vxpose.xlu0.c.b16.end [8/8] 0, 128
    %v465 = vpop.trf.xlu0
    %v466 = vpop.trf.xlu0
    %v467 = vpop.trf.xlu0
    %v468 = vpop.trf.xlu0
    %v469 = vpop.trf.xlu0
    %v470 = vpop.trf.xlu0
    %v471 = vpop.trf.xlu0
    %v472 = vpop.trf.xlu0
    %v474 = vsel %vm351, %v465, 0
    %v477 = vsel %vm351, %v466, 0
    %v480 = vsel %vm351, %v467, 0
    %v483 = vsel %vm351, %v468, 0
    %v486 = vsel %vm364, %v329, 0
    %488 = vmatpush.bf16.msra.mxu0 0
    %489 = vmatpush.bf16.msra.mxu0 0
    %490 = vmatpush.bf16.msra.mxu0 0
    %491 = vmatpush.bf16.msra.mxu0 0
    %492 = vmatpush.bf16.msra.mxu0 0
    %493 = vmatpush.bf16.msra.mxu0 0
    %494 = vmatpush.bf16.msra.mxu0 0
    %495 = vmatpush.bf16.msra.mxu0 %v486
    %496 = vmatmul.bf16.gmra.mxu0 %v474
    %v497 = vpop.f32.mrf.mxu0
    %v498 = vadd.f32 0.0, %v497
    %v499 = vpop.f32.mrf.mxu0
    %v500 = vadd.f32 0.0, %v499
    %501 = vmatmul.bf16.gmra.mxu0 %v477
    %v502 = vpop.f32.mrf.mxu0
    %v503 = vadd.f32 0.0, %v502
    %v504 = vpop.f32.mrf.mxu0
    %v505 = vadd.f32 0.0, %v504
    %506 = vmatmul.bf16.gmra.mxu0 %v480
    %v507 = vpop.f32.mrf.mxu0
    %v508 = vadd.f32 0.0, %v507
    %v509 = vpop.f32.mrf.mxu0
    %v510 = vadd.f32 0.0, %v509
    %511 = vmatmul.bf16.gmra.mxu0 %v483
    %v512 = vpop.f32.mrf.mxu0
    %v513 = vadd.f32 0.0, %v512
    %v514 = vpop.f32.mrf.mxu0
    %v515 = vadd.f32 0.0, %v514
    %516 = vdwg.mxu0
    %517 = vxpose.xlu0.c.b16.start [1/8] %v326, 128
    %518 = vxpose.xlu0.c.b16.cont [2/8] 0, 128
    %519 = vxpose.xlu0.c.b16.cont [3/8] 0, 128
    %520 = vxpose.xlu0.c.b16.cont [4/8] 0, 128
    %521 = vxpose.xlu0.c.b16.cont [5/8] 0, 128
    %522 = vxpose.xlu0.c.b16.cont [6/8] 0, 128
    %523 = vxpose.xlu0.c.b16.cont [7/8] 0, 128
    %524 = vxpose.xlu0.c.b16.end [8/8] 0, 128
    %v525 = vpop.trf.xlu0
    %v526 = vpop.trf.xlu0
    %v527 = vpop.trf.xlu0
    %v528 = vpop.trf.xlu0
    %v529 = vpop.trf.xlu0
    %v530 = vpop.trf.xlu0
    %v531 = vpop.trf.xlu0
    %v532 = vpop.trf.xlu0
    %v534 = vsel %vm351, %v525, 0
    %v537 = vsel %vm351, %v526, 0
    %v540 = vsel %vm351, %v527, 0
    %v543 = vsel %vm351, %v528, 0
    %v546 = vsel %vm364, %v330, 0
    %548 = vmatpush.bf16.msra.mxu0 0
    %549 = vmatpush.bf16.msra.mxu0 0
    %550 = vmatpush.bf16.msra.mxu0 0
    %551 = vmatpush.bf16.msra.mxu0 0
    %552 = vmatpush.bf16.msra.mxu0 0
    %553 = vmatpush.bf16.msra.mxu0 0
    %554 = vmatpush.bf16.msra.mxu0 0
    %555 = vmatpush.bf16.msra.mxu0 %v546
    %556 = vmatmul.bf16.gmra.mxu0 %v534
    %v557 = vpop.f32.mrf.mxu0
    %v558 = vadd.f32 0.0, %v557
    %v559 = vpop.f32.mrf.mxu0
    %v560 = vadd.f32 0.0, %v559
    %561 = vmatmul.bf16.gmra.mxu0 %v537
    %v562 = vpop.f32.mrf.mxu0
    %v563 = vadd.f32 0.0, %v562
    %v564 = vpop.f32.mrf.mxu0
    %v565 = vadd.f32 0.0, %v564
    %566 = vmatmul.bf16.gmra.mxu0 %v540
    %v567 = vpop.f32.mrf.mxu0
    %v568 = vadd.f32 0.0, %v567
    %v569 = vpop.f32.mrf.mxu0
    %v570 = vadd.f32 0.0, %v569
    %571 = vmatmul.bf16.gmra.mxu0 %v543
    %v572 = vpop.f32.mrf.mxu0
    %v573 = vadd.f32 0.0, %v572
    %v574 = vpop.f32.mrf.mxu0
    %v575 = vadd.f32 0.0, %v574
    %576 = vdwg.mxu0
    %v577 = vmul.f32 %v378, 0.35355338
    %v578 = vmul.f32 %v380, 0.35355338
    %v579 = vmul.f32 %v383, 0.35355338
    %v580 = vmul.f32 %v385, 0.35355338
    %v581 = vmul.f32 %v388, 0.35355338
    %v582 = vmul.f32 %v390, 0.35355338
    %v583 = vmul.f32 %v393, 0.35355338
    %v584 = vmul.f32 %v395, 0.35355338
    %v585 = vmul.f32 %v438, 0.35355338
    %v586 = vmul.f32 %v440, 0.35355338
    %v587 = vmul.f32 %v443, 0.35355338
    %v588 = vmul.f32 %v445, 0.35355338
    %v589 = vmul.f32 %v448, 0.35355338
    %v590 = vmul.f32 %v450, 0.35355338
    %v591 = vmul.f32 %v453, 0.35355338
    %v592 = vmul.f32 %v455, 0.35355338
    %v593 = vmul.f32 %v498, 0.35355338
    %v594 = vmul.f32 %v500, 0.35355338
    %v595 = vmul.f32 %v503, 0.35355338
    %v596 = vmul.f32 %v505, 0.35355338
    %v597 = vmul.f32 %v508, 0.35355338
    %v598 = vmul.f32 %v510, 0.35355338
    %v599 = vmul.f32 %v513, 0.35355338
    %v600 = vmul.f32 %v515, 0.35355338
    %v601 = vmul.f32 %v558, 0.35355338
    %v602 = vmul.f32 %v560, 0.35355338
    %v603 = vmul.f32 %v563, 0.35355338
    %v604 = vmul.f32 %v565, 0.35355338
    %v605 = vmul.f32 %v568, 0.35355338
    %v606 = vmul.f32 %v570, 0.35355338
    %v607 = vmul.f32 %v573, 0.35355338
    %v608 = vmul.f32 %v575, 0.35355338
    %vm609 = vcmask 523264
    %v610 = vsel %vm609, %v577, -inf
    %611 = vmax.xlane.f32.xlu0 %v610
    %v612 = vpop.xlane.xlu0 %611
    %v613 = vsel %vm609, %v578, -inf
    %614 = vmax.xlane.f32.xlu0 %v613
    %v615 = vpop.xlane.xlu0 %614
    %v616 = vsel %vm609, %v579, -inf
    %617 = vmax.xlane.f32.xlu0 %v616
    %v618 = vpop.xlane.xlu0 %617
    %v619 = vsel %vm609, %v580, -inf
    %620 = vmax.xlane.f32.xlu0 %v619
    %v621 = vpop.xlane.xlu0 %620
    %v622 = vsel %vm609, %v581, -inf
    %623 = vmax.xlane.f32.xlu0 %v622
    %v624 = vpop.xlane.xlu0 %623
    %v625 = vsel %vm609, %v582, -inf
    %626 = vmax.xlane.f32.xlu0 %v625
    %v627 = vpop.xlane.xlu0 %626
    %v628 = vsel %vm609, %v583, -inf
    %629 = vmax.xlane.f32.xlu0 %v628
    %v630 = vpop.xlane.xlu0 %629
    %v631 = vsel %vm609, %v584, -inf
    %632 = vmax.xlane.f32.xlu0 %v631
    %v633 = vpop.xlane.xlu0 %632
    %v634 = vsel %vm609, %v585, -inf
    %635 = vmax.xlane.f32.xlu0 %v634
    %v636 = vpop.xlane.xlu0 %635
    %v637 = vsel %vm609, %v586, -inf
    %638 = vmax.xlane.f32.xlu0 %v637
    %v639 = vpop.xlane.xlu0 %638
    %v640 = vsel %vm609, %v587, -inf
    %641 = vmax.xlane.f32.xlu0 %v640
    %v642 = vpop.xlane.xlu0 %641
    %v643 = vsel %vm609, %v588, -inf
    %644 = vmax.xlane.f32.xlu0 %v643
    %v645 = vpop.xlane.xlu0 %644
    %v646 = vsel %vm609, %v589, -inf
    %647 = vmax.xlane.f32.xlu0 %v646
    %v648 = vpop.xlane.xlu0 %647
    %v649 = vsel %vm609, %v590, -inf
    %650 = vmax.xlane.f32.xlu0 %v649
    %v651 = vpop.xlane.xlu0 %650
    %v652 = vsel %vm609, %v591, -inf
    %653 = vmax.xlane.f32.xlu0 %v652
    %v654 = vpop.xlane.xlu0 %653
    %v655 = vsel %vm609, %v592, -inf
    %656 = vmax.xlane.f32.xlu0 %v655
    %v657 = vpop.xlane.xlu0 %656
    %v658 = vsel %vm609, %v593, -inf
    %659 = vmax.xlane.f32.xlu0 %v658
    %v660 = vpop.xlane.xlu0 %659
    %v661 = vsel %vm609, %v594, -inf
    %662 = vmax.xlane.f32.xlu0 %v661
    %v663 = vpop.xlane.xlu0 %662
    %v664 = vsel %vm609, %v595, -inf
    %665 = vmax.xlane.f32.xlu0 %v664
    %v666 = vpop.xlane.xlu0 %665
    %v667 = vsel %vm609, %v596, -inf
    %668 = vmax.xlane.f32.xlu0 %v667
    %v669 = vpop.xlane.xlu0 %668
    %v670 = vsel %vm609, %v597, -inf
    %671 = vmax.xlane.f32.xlu0 %v670
    %v672 = vpop.xlane.xlu0 %671
    %v673 = vsel %vm609, %v598, -inf
    %674 = vmax.xlane.f32.xlu0 %v673
    %v675 = vpop.xlane.xlu0 %674
    %v676 = vsel %vm609, %v599, -inf
    %677 = vmax.xlane.f32.xlu0 %v676
    %v678 = vpop.xlane.xlu0 %677
    %v679 = vsel %vm609, %v600, -inf
    %680 = vmax.xlane.f32.xlu0 %v679
    %v681 = vpop.xlane.xlu0 %680
    %v682 = vsel %vm609, %v601, -inf
    %683 = vmax.xlane.f32.xlu0 %v682
    %v684 = vpop.xlane.xlu0 %683
    %v685 = vsel %vm609, %v602, -inf
    %686 = vmax.xlane.f32.xlu0 %v685
    %v687 = vpop.xlane.xlu0 %686
    %v688 = vsel %vm609, %v603, -inf
    %689 = vmax.xlane.f32.xlu0 %v688
    %v690 = vpop.xlane.xlu0 %689
    %v691 = vsel %vm609, %v604, -inf
    %692 = vmax.xlane.f32.xlu0 %v691
    %v693 = vpop.xlane.xlu0 %692
    %v694 = vsel %vm609, %v605, -inf
    %695 = vmax.xlane.f32.xlu0 %v694
    %v696 = vpop.xlane.xlu0 %695
    %v697 = vsel %vm609, %v606, -inf
    %698 = vmax.xlane.f32.xlu0 %v697
    %v699 = vpop.xlane.xlu0 %698
    %v700 = vsel %vm609, %v607, -inf
    %701 = vmax.xlane.f32.xlu0 %v700
    %v702 = vpop.xlane.xlu0 %701
    %v703 = vsel %vm609, %v608, -inf
    %704 = vmax.xlane.f32.xlu0 %v703
    %v705 = vpop.xlane.xlu0 %704
    %v706 = vsub.f32 %v577, %v612
    %v707 = vsub.f32 %v578, %v615
    %v708 = vsub.f32 %v579, %v618
    %v709 = vsub.f32 %v580, %v621
    %v710 = vsub.f32 %v581, %v624
    %v711 = vsub.f32 %v582, %v627
    %v712 = vsub.f32 %v583, %v630
    %v713 = vsub.f32 %v584, %v633
    %v714 = vsub.f32 %v585, %v636
    %v715 = vsub.f32 %v586, %v639
    %v716 = vsub.f32 %v587, %v642
    %v717 = vsub.f32 %v588, %v645
    %v718 = vsub.f32 %v589, %v648
    %v719 = vsub.f32 %v590, %v651
    %v720 = vsub.f32 %v591, %v654
    %v721 = vsub.f32 %v592, %v657
    %v722 = vsub.f32 %v593, %v660
    %v723 = vsub.f32 %v594, %v663
    %v724 = vsub.f32 %v595, %v666
    %v725 = vsub.f32 %v596, %v669
    %v726 = vsub.f32 %v597, %v672
    %v727 = vsub.f32 %v598, %v675
    %v728 = vsub.f32 %v599, %v678
    %v729 = vsub.f32 %v600, %v681
    %v730 = vsub.f32 %v601, %v684
    %v731 = vsub.f32 %v602, %v687
    %v732 = vsub.f32 %v603, %v690
    %v733 = vsub.f32 %v604, %v693
    %v734 = vsub.f32 %v605, %v696
    %v735 = vsub.f32 %v606, %v699
    %v736 = vsub.f32 %v607, %v702
    %v737 = vsub.f32 %v608, %v705
    %v738 = vmul.f32 %v706, 1.442695
    %v739 = vpow.pop %v738
    %v740 = vmul.f32 %v707, 1.442695
    %v741 = vpow.pop %v740
    %v742 = vmul.f32 %v708, 1.442695
    %v743 = vpow.pop %v742
    %v744 = vmul.f32 %v709, 1.442695
    %v745 = vpow.pop %v744
    %v746 = vmul.f32 %v710, 1.442695
    %v747 = vpow.pop %v746
    %v748 = vmul.f32 %v711, 1.442695
    %v749 = vpow.pop %v748
    %v750 = vmul.f32 %v712, 1.442695
    %v751 = vpow.pop %v750
    %v752 = vmul.f32 %v713, 1.442695
    %v753 = vpow.pop %v752
    %v754 = vmul.f32 %v714, 1.442695
    %v755 = vpow.pop %v754
    %v756 = vmul.f32 %v715, 1.442695
    %v757 = vpow.pop %v756
    %v758 = vmul.f32 %v716, 1.442695
    %v759 = vpow.pop %v758
    %v760 = vmul.f32 %v717, 1.442695
    %v761 = vpow.pop %v760
    %v762 = vmul.f32 %v718, 1.442695
    %v763 = vpow.pop %v762
    %v764 = vmul.f32 %v719, 1.442695
    %v765 = vpow.pop %v764
    %v766 = vmul.f32 %v720, 1.442695
    %v767 = vpow.pop %v766
    %v768 = vmul.f32 %v721, 1.442695
    %v769 = vpow.pop %v768
    %v770 = vmul.f32 %v722, 1.442695
    %v771 = vpow.pop %v770
    %v772 = vmul.f32 %v723, 1.442695
    %v773 = vpow.pop %v772
    %v774 = vmul.f32 %v724, 1.442695
    %v775 = vpow.pop %v774
    %v776 = vmul.f32 %v725, 1.442695
    %v777 = vpow.pop %v776
    %v778 = vmul.f32 %v726, 1.442695
    %v779 = vpow.pop %v778
    %v780 = vmul.f32 %v727, 1.442695
    %v781 = vpow.pop %v780
    %v782 = vmul.f32 %v728, 1.442695
    %v783 = vpow.pop %v782
    %v784 = vmul.f32 %v729, 1.442695
    %v785 = vpow.pop %v784
    %v786 = vmul.f32 %v730, 1.442695
    %v787 = vpow.pop %v786
    %v788 = vmul.f32 %v731, 1.442695
    %v789 = vpow.pop %v788
    %v790 = vmul.f32 %v732, 1.442695
    %v791 = vpow.pop %v790
    %v792 = vmul.f32 %v733, 1.442695
    %v793 = vpow.pop %v792
    %v794 = vmul.f32 %v734, 1.442695
    %v795 = vpow.pop %v794
    %v796 = vmul.f32 %v735, 1.442695
    %v797 = vpow.pop %v796
    %v798 = vmul.f32 %v736, 1.442695
    %v799 = vpow.pop %v798
    %v800 = vmul.f32 %v737, 1.442695
    %v801 = vpow.pop %v800
    %v802 = vsel %vm609, %v739, 0.0
    %803 = vadd.xlane.f32.xlu0 %v802
    %v804 = vpop.xlane.xlu0 %803
    %v805 = vsel %vm609, %v741, 0.0
    %806 = vadd.xlane.f32.xlu0 %v805
    %v807 = vpop.xlane.xlu0 %806
    %v808 = vsel %vm609, %v743, 0.0
    %809 = vadd.xlane.f32.xlu0 %v808
    %v810 = vpop.xlane.xlu0 %809
    %v811 = vsel %vm609, %v745, 0.0
    %812 = vadd.xlane.f32.xlu0 %v811
    %v813 = vpop.xlane.xlu0 %812
    %v814 = vsel %vm609, %v747, 0.0
    %815 = vadd.xlane.f32.xlu0 %v814
    %v816 = vpop.xlane.xlu0 %815
    %v817 = vsel %vm609, %v749, 0.0
    %818 = vadd.xlane.f32.xlu0 %v817
    %v819 = vpop.xlane.xlu0 %818
    %v820 = vsel %vm609, %v751, 0.0
    %821 = vadd.xlane.f32.xlu0 %v820
    %v822 = vpop.xlane.xlu0 %821
    %v823 = vsel %vm609, %v753, 0.0
    %824 = vadd.xlane.f32.xlu0 %v823
    %v825 = vpop.xlane.xlu0 %824
    %v826 = vsel %vm609, %v755, 0.0
    %827 = vadd.xlane.f32.xlu0 %v826
    %v828 = vpop.xlane.xlu0 %827
    %v829 = vsel %vm609, %v757, 0.0
    %830 = vadd.xlane.f32.xlu0 %v829
    %v831 = vpop.xlane.xlu0 %830
    %v832 = vsel %vm609, %v759, 0.0
    %833 = vadd.xlane.f32.xlu0 %v832
    %v834 = vpop.xlane.xlu0 %833
    %v835 = vsel %vm609, %v761, 0.0
    %836 = vadd.xlane.f32.xlu0 %v835
    %v837 = vpop.xlane.xlu0 %836
    %v838 = vsel %vm609, %v763, 0.0
    %839 = vadd.xlane.f32.xlu0 %v838
    %v840 = vpop.xlane.xlu0 %839
    %v841 = vsel %vm609, %v765, 0.0
    %842 = vadd.xlane.f32.xlu0 %v841
    %v843 = vpop.xlane.xlu0 %842
    %v844 = vsel %vm609, %v767, 0.0
    %845 = vadd.xlane.f32.xlu0 %v844
    %v846 = vpop.xlane.xlu0 %845
    %v847 = vsel %vm609, %v769, 0.0
    %848 = vadd.xlane.f32.xlu0 %v847
    %v849 = vpop.xlane.xlu0 %848
    %v850 = vsel %vm609, %v771, 0.0
    %851 = vadd.xlane.f32.xlu0 %v850
    %v852 = vpop.xlane.xlu0 %851
    %v853 = vsel %vm609, %v773, 0.0
    %854 = vadd.xlane.f32.xlu0 %v853
    %v855 = vpop.xlane.xlu0 %854
    %v856 = vsel %vm609, %v775, 0.0
    %857 = vadd.xlane.f32.xlu0 %v856
    %v858 = vpop.xlane.xlu0 %857
    %v859 = vsel %vm609, %v777, 0.0
    %860 = vadd.xlane.f32.xlu0 %v859
    %v861 = vpop.xlane.xlu0 %860
    %v862 = vsel %vm609, %v779, 0.0
    %863 = vadd.xlane.f32.xlu0 %v862
    %v864 = vpop.xlane.xlu0 %863
    %v865 = vsel %vm609, %v781, 0.0
    %866 = vadd.xlane.f32.xlu0 %v865
    %v867 = vpop.xlane.xlu0 %866
    %v868 = vsel %vm609, %v783, 0.0
    %869 = vadd.xlane.f32.xlu0 %v868
    %v870 = vpop.xlane.xlu0 %869
    %v871 = vsel %vm609, %v785, 0.0
    %872 = vadd.xlane.f32.xlu0 %v871
    %v873 = vpop.xlane.xlu0 %872
    %v874 = vsel %vm609, %v787, 0.0
    %875 = vadd.xlane.f32.xlu0 %v874
    %v876 = vpop.xlane.xlu0 %875
    %v877 = vsel %vm609, %v789, 0.0
    %878 = vadd.xlane.f32.xlu0 %v877
    %v879 = vpop.xlane.xlu0 %878
    %v880 = vsel %vm609, %v791, 0.0
    %881 = vadd.xlane.f32.xlu0 %v880
    %v882 = vpop.xlane.xlu0 %881
    %v883 = vsel %vm609, %v793, 0.0
    %884 = vadd.xlane.f32.xlu0 %v883
    %v885 = vpop.xlane.xlu0 %884
    %v886 = vsel %vm609, %v795, 0.0
    %887 = vadd.xlane.f32.xlu0 %v886
    %v888 = vpop.xlane.xlu0 %887
    %v889 = vsel %vm609, %v797, 0.0
    %890 = vadd.xlane.f32.xlu0 %v889
    %v891 = vpop.xlane.xlu0 %890
    %v892 = vsel %vm609, %v799, 0.0
    %893 = vadd.xlane.f32.xlu0 %v892
    %v894 = vpop.xlane.xlu0 %893
    %v895 = vsel %vm609, %v801, 0.0
    %896 = vadd.xlane.f32.xlu0 %v895
    %v897 = vpop.xlane.xlu0 %896
    %v898 = vrcp.pop %v804
    %v899 = vrcp.pop %v807
    %v900 = vrcp.pop %v810
    %v901 = vrcp.pop %v813
    %v902 = vrcp.pop %v816
    %v903 = vrcp.pop %v819
    %v904 = vrcp.pop %v822
    %v905 = vrcp.pop %v825
    %v906 = vrcp.pop %v828
    %v907 = vrcp.pop %v831
    %v908 = vrcp.pop %v834
    %v909 = vrcp.pop %v837
    %v910 = vrcp.pop %v840
    %v911 = vrcp.pop %v843
    %v912 = vrcp.pop %v846
    %v913 = vrcp.pop %v849
    %v914 = vrcp.pop %v852
    %v915 = vrcp.pop %v855
    %v916 = vrcp.pop %v858
    %v917 = vrcp.pop %v861
    %v918 = vrcp.pop %v864
    %v919 = vrcp.pop %v867
    %v920 = vrcp.pop %v870
    %v921 = vrcp.pop %v873
    %v922 = vrcp.pop %v876
    %v923 = vrcp.pop %v879
    %v924 = vrcp.pop %v882
    %v925 = vrcp.pop %v885
    %v926 = vrcp.pop %v888
    %v927 = vrcp.pop %v891
    %v928 = vrcp.pop %v894
    %v929 = vrcp.pop %v897
    %v930 = vmul.f32 %v739, %v898
    %v931 = vmul.f32 %v741, %v899
    %v932 = vmul.f32 %v743, %v900
    %v933 = vmul.f32 %v745, %v901
    %v934 = vmul.f32 %v747, %v902
    %v935 = vmul.f32 %v749, %v903
    %v936 = vmul.f32 %v751, %v904
    %v937 = vmul.f32 %v753, %v905
    %v938 = vmul.f32 %v755, %v906
    %v939 = vmul.f32 %v757, %v907
    %v940 = vmul.f32 %v759, %v908
    %v941 = vmul.f32 %v761, %v909
    %v942 = vmul.f32 %v763, %v910
    %v943 = vmul.f32 %v765, %v911
    %v944 = vmul.f32 %v767, %v912
    %v945 = vmul.f32 %v769, %v913
    %v946 = vmul.f32 %v771, %v914
    %v947 = vmul.f32 %v773, %v915
    %v948 = vmul.f32 %v775, %v916
    %v949 = vmul.f32 %v777, %v917
    %v950 = vmul.f32 %v779, %v918
    %v951 = vmul.f32 %v781, %v919
    %v952 = vmul.f32 %v783, %v920
    %v953 = vmul.f32 %v785, %v921
    %v954 = vmul.f32 %v787, %v922
    %v955 = vmul.f32 %v789, %v923
    %v956 = vmul.f32 %v791, %v924
    %v957 = vmul.f32 %v793, %v925
    %v958 = vmul.f32 %v795, %v926
    %v959 = vmul.f32 %v797, %v927
    %v960 = vmul.f32 %v799, %v928
    %v961 = vmul.f32 %v801, %v929
    %v962 = vpack.c.bf16 %v930, %v930
    %v963 = vpack.c.bf16 %v931, %v931
    %v964 = vpack.c.bf16 %v932, %v932
    %v965 = vpack.c.bf16 %v933, %v933
    %v966 = vpack.c.bf16 %v934, %v934
    %v967 = vpack.c.bf16 %v935, %v935
    %v968 = vpack.c.bf16 %v936, %v936
    %v969 = vpack.c.bf16 %v937, %v937
    %v970 = vpack.c.bf16 %v938, %v938
    %v971 = vpack.c.bf16 %v939, %v939
    %v972 = vpack.c.bf16 %v940, %v940
    %v973 = vpack.c.bf16 %v941, %v941
    %v974 = vpack.c.bf16 %v942, %v942
    %v975 = vpack.c.bf16 %v943, %v943
    %v976 = vpack.c.bf16 %v944, %v944
    %v977 = vpack.c.bf16 %v945, %v945
    %v978 = vpack.c.bf16 %v946, %v946
    %v979 = vpack.c.bf16 %v947, %v947
    %v980 = vpack.c.bf16 %v948, %v948
    %v981 = vpack.c.bf16 %v949, %v949
    %v982 = vpack.c.bf16 %v950, %v950
    %v983 = vpack.c.bf16 %v951, %v951
    %v984 = vpack.c.bf16 %v952, %v952
    %v985 = vpack.c.bf16 %v953, %v953
    %v986 = vpack.c.bf16 %v954, %v954
    %v987 = vpack.c.bf16 %v955, %v955
    %v988 = vpack.c.bf16 %v956, %v956
    %v989 = vpack.c.bf16 %v957, %v957
    %v990 = vpack.c.bf16 %v958, %v958
    %v991 = vpack.c.bf16 %v959, %v959
    %v992 = vpack.c.bf16 %v960, %v960
    %v993 = vpack.c.bf16 %v961, %v961
    %v1002 = vunpack.c.l.b16 %v962
    %v1003 = vunpack.c.l.b16 %v963
    %v1004 = vunpack.c.l.b16 %v964
    %v1005 = vunpack.c.l.b16 %v965
    %v1006 = vunpack.c.l.b16 %v966
    %v1007 = vunpack.c.l.b16 %v967
    %v1008 = vunpack.c.l.b16 %v968
    %v1009 = vunpack.c.l.b16 %v969
    %v1010 = vpack.c.b16 %v1003, %v1002
    %v1011 = vpack.c.b16 %v1005, %v1004
    %v1012 = vpack.c.b16 %v1007, %v1006
    %v1013 = vpack.c.b16 %v1009, %v1008
    %v1015 = vsel %vm609, %v331, 0
    %v1018 = vsel %vm609, %v1010, 0
    %v1021 = vsel %vm609, %v1011, 0
    %v1024 = vsel %vm609, %v1012, 0
    %v1027 = vsel %vm609, %v1013, 0
    %1029 = vmatpush.bf16.xpose.msra.mxu0 0
    %1030 = vmatpush.bf16.xpose.msra.mxu0 0
    %1031 = vmatpush.bf16.xpose.msra.mxu0 0
    %1032 = vmatpush.bf16.xpose.msra.mxu0 0
    %1033 = vmatpush.bf16.xpose.msra.mxu0 %v1027
    %1034 = vmatpush.bf16.xpose.msra.mxu0 %v1024
    %1035 = vmatpush.bf16.xpose.msra.mxu0 %v1021
    %1036 = vmatpush.bf16.xpose.msra.mxu0 %v1018
    %1037 = vmatmul.bf16.gmra.mxu0 %v1015
    %v1038 = vpop.f32.mrf.mxu0
    %v1039 = vadd.f32 0.0, %v1038
    %v1040 = vpop.f32.mrf.mxu0
    %1041 = vdwg.mxu0
    %v1050 = vunpack.c.l.b16 %v970
    %v1051 = vunpack.c.l.b16 %v971
    %v1052 = vunpack.c.l.b16 %v972
    %v1053 = vunpack.c.l.b16 %v973
    %v1054 = vunpack.c.l.b16 %v974
    %v1055 = vunpack.c.l.b16 %v975
    %v1056 = vunpack.c.l.b16 %v976
    %v1057 = vunpack.c.l.b16 %v977
    %v1058 = vpack.c.b16 %v1051, %v1050
    %v1059 = vpack.c.b16 %v1053, %v1052
    %v1060 = vpack.c.b16 %v1055, %v1054
    %v1061 = vpack.c.b16 %v1057, %v1056
    %v1063 = vsel %vm609, %v332, 0
    %v1066 = vsel %vm609, %v1058, 0
    %v1069 = vsel %vm609, %v1059, 0
    %v1072 = vsel %vm609, %v1060, 0
    %v1075 = vsel %vm609, %v1061, 0
    %1077 = vmatpush.bf16.xpose.msra.mxu0 0
    %1078 = vmatpush.bf16.xpose.msra.mxu0 0
    %1079 = vmatpush.bf16.xpose.msra.mxu0 0
    %1080 = vmatpush.bf16.xpose.msra.mxu0 0
    %1081 = vmatpush.bf16.xpose.msra.mxu0 %v1075
    %1082 = vmatpush.bf16.xpose.msra.mxu0 %v1072
    %1083 = vmatpush.bf16.xpose.msra.mxu0 %v1069
    %1084 = vmatpush.bf16.xpose.msra.mxu0 %v1066
    %1085 = vmatmul.bf16.gmra.mxu0 %v1063
    %v1086 = vpop.f32.mrf.mxu0
    %v1087 = vadd.f32 0.0, %v1086
    %v1088 = vpop.f32.mrf.mxu0
    %1089 = vdwg.mxu0
    %v1098 = vunpack.c.l.b16 %v978
    %v1099 = vunpack.c.l.b16 %v979
    %v1100 = vunpack.c.l.b16 %v980
    %v1101 = vunpack.c.l.b16 %v981
    %v1102 = vunpack.c.l.b16 %v982
    %v1103 = vunpack.c.l.b16 %v983
    %v1104 = vunpack.c.l.b16 %v984
    %v1105 = vunpack.c.l.b16 %v985
    %v1106 = vpack.c.b16 %v1099, %v1098
    %v1107 = vpack.c.b16 %v1101, %v1100
    %v1108 = vpack.c.b16 %v1103, %v1102
    %v1109 = vpack.c.b16 %v1105, %v1104
    %v1111 = vsel %vm609, %v333, 0
    %v1114 = vsel %vm609, %v1106, 0
    %v1117 = vsel %vm609, %v1107, 0
    %v1120 = vsel %vm609, %v1108, 0
    %v1123 = vsel %vm609, %v1109, 0
    %1125 = vmatpush.bf16.xpose.msra.mxu0 0
    %1126 = vmatpush.bf16.xpose.msra.mxu0 0
    %1127 = vmatpush.bf16.xpose.msra.mxu0 0
    %1128 = vmatpush.bf16.xpose.msra.mxu0 0
    %1129 = vmatpush.bf16.xpose.msra.mxu0 %v1123
    %1130 = vmatpush.bf16.xpose.msra.mxu0 %v1120
    %1131 = vmatpush.bf16.xpose.msra.mxu0 %v1117
    %1132 = vmatpush.bf16.xpose.msra.mxu0 %v1114
    %1133 = vmatmul.bf16.gmra.mxu0 %v1111
    %v1134 = vpop.f32.mrf.mxu0
    %v1135 = vadd.f32 0.0, %v1134
    %v1136 = vpop.f32.mrf.mxu0
    %1137 = vdwg.mxu0
    %v1146 = vunpack.c.l.b16 %v986
    %v1147 = vunpack.c.l.b16 %v987
    %v1148 = vunpack.c.l.b16 %v988
    %v1149 = vunpack.c.l.b16 %v989
    %v1150 = vunpack.c.l.b16 %v990
    %v1151 = vunpack.c.l.b16 %v991
    %v1152 = vunpack.c.l.b16 %v992
    %v1153 = vunpack.c.l.b16 %v993
    %v1154 = vpack.c.b16 %v1147, %v1146
    %v1155 = vpack.c.b16 %v1149, %v1148
    %v1156 = vpack.c.b16 %v1151, %v1150
    %v1157 = vpack.c.b16 %v1153, %v1152
    %v1159 = vsel %vm609, %v334, 0
    %v1162 = vsel %vm609, %v1154, 0
    %v1165 = vsel %vm609, %v1155, 0
    %v1168 = vsel %vm609, %v1156, 0
    %v1171 = vsel %vm609, %v1157, 0
    %1173 = vmatpush.bf16.xpose.msra.mxu0 0
    %1174 = vmatpush.bf16.xpose.msra.mxu0 0
    %1175 = vmatpush.bf16.xpose.msra.mxu0 0
    %1176 = vmatpush.bf16.xpose.msra.mxu0 0
    %1177 = vmatpush.bf16.xpose.msra.mxu0 %v1171
    %1178 = vmatpush.bf16.xpose.msra.mxu0 %v1168
    %1179 = vmatpush.bf16.xpose.msra.mxu0 %v1165
    %1180 = vmatpush.bf16.xpose.msra.mxu0 %v1162
    %1181 = vmatmul.bf16.gmra.mxu0 %v1159
    %v1182 = vpop.f32.mrf.mxu0
    %v1183 = vadd.f32 0.0, %v1182
    %v1184 = vpop.f32.mrf.mxu0
    %1185 = vdwg.mxu0
    %v1186 = vpack.c.bf16 %v1039, %v1039
    %v1187 = vpack.c.bf16 %v1087, %v1087
    %v1188 = vpack.c.bf16 %v1135, %v1135
    %v1189 = vpack.c.bf16 %v1183, %v1183
    %vm1190 = vcmask 519168
    %1191 = vst.msk [vmem:[#allocation2] sm:$0xf] %vm1190, %v1186
    %1192 = vst.msk [vmem:[#allocation2 + $0x4] sm:$0xf] %vm1190, %v1187
    %1193 = vst.msk [vmem:[#allocation2 + $0x8] sm:$0xf] %vm1190, %v1188
    %1194 = vst.msk [vmem:[#allocation2 + $0xc] sm:$0xf] %vm1190, %v1189
    %v1196 = vunpack.c.l.b16 %v323
    %v1197 = vpack.c.b16 %v1196, %v1196
    %1198 = vrot.lane.b32.xlu0 %v1197, 64
    %v1199 = vpop.permute.xlu0 %1198
    %1201 = vxpose.xlu0.c.b16.start [1/8] %v1199, 128
    %1202 = vxpose.xlu0.c.b16.cont [2/8] 0, 128
    %1203 = vxpose.xlu0.c.b16.cont [3/8] 0, 128
    %1204 = vxpose.xlu0.c.b16.cont [4/8] 0, 128
    %1205 = vxpose.xlu0.c.b16.cont [5/8] 0, 128
    %1206 = vxpose.xlu0.c.b16.cont [6/8] 0, 128
    %1207 = vxpose.xlu0.c.b16.cont [7/8] 0, 128
    %1208 = vxpose.xlu0.c.b16.end [8/8] 0, 128
    %v1209 = vpop.trf.xlu0
    %v1210 = vpop.trf.xlu0
    %v1211 = vpop.trf.xlu0
    %v1212 = vpop.trf.xlu0
    %v1213 = vpop.trf.xlu0
    %v1214 = vpop.trf.xlu0
    %v1215 = vpop.trf.xlu0
    %v1216 = vpop.trf.xlu0
    %v1218 = vunpack.c.l.b16 %v327
    %v1219 = vpack.c.b16 %v1218, %v1218
    %1220 = vrot.lane.b32.xlu0 %v1219, 64
    %v1221 = vpop.permute.xlu0 %1220
    %v1223 = vsel %vm351, %v1209, 0
    %v1226 = vsel %vm351, %v1210, 0
    %v1229 = vsel %vm351, %v1211, 0
    %v1232 = vsel %vm351, %v1212, 0
    %v1235 = vsel %vm364, %v1221, 0
    %1237 = vmatpush.bf16.msra.mxu0 0
    %1238 = vmatpush.bf16.msra.mxu0 0
    %1239 = vmatpush.bf16.msra.mxu0 0
    %1240 = vmatpush.bf16.msra.mxu0 0
    %1241 = vmatpush.bf16.msra.mxu0 0
    %1242 = vmatpush.bf16.msra.mxu0 0
    %1243 = vmatpush.bf16.msra.mxu0 0
    %1244 = vmatpush.bf16.msra.mxu0 %v1235
    %1245 = vmatmul.bf16.gmra.mxu0 %v1223
    %v1246 = vpop.f32.mrf.mxu0
    %v1247 = vadd.f32 0.0, %v1246
    %v1248 = vpop.f32.mrf.mxu0
    %v1249 = vadd.f32 0.0, %v1248
    %1250 = vmatmul.bf16.gmra.mxu0 %v1226
    %v1251 = vpop.f32.mrf.mxu0
    %v1252 = vadd.f32 0.0, %v1251
    %v1253 = vpop.f32.mrf.mxu0
    %v1254 = vadd.f32 0.0, %v1253
    %1255 = vmatmul.bf16.gmra.mxu0 %v1229
    %v1256 = vpop.f32.mrf.mxu0
    %v1257 = vadd.f32 0.0, %v1256
    %v1258 = vpop.f32.mrf.mxu0
    %v1259 = vadd.f32 0.0, %v1258
    %1260 = vmatmul.bf16.gmra.mxu0 %v1232
    %v1261 = vpop.f32.mrf.mxu0
    %v1262 = vadd.f32 0.0, %v1261
    %v1263 = vpop.f32.mrf.mxu0
    %v1264 = vadd.f32 0.0, %v1263
    %1265 = vdwg.mxu0
    %v1267 = vunpack.c.l.b16 %v324
    %v1268 = vpack.c.b16 %v1267, %v1267
    %1269 = vrot.lane.b32.xlu0 %v1268, 64
    %v1270 = vpop.permute.xlu0 %1269
    %1272 = vxpose.xlu0.c.b16.start [1/8] %v1270, 128
    %1273 = vxpose.xlu0.c.b16.cont [2/8] 0, 128
    %1274 = vxpose.xlu0.c.b16.cont [3/8] 0, 128
    %1275 = vxpose.xlu0.c.b16.cont [4/8] 0, 128
    %1276 = vxpose.xlu0.c.b16.cont [5/8] 0, 128
    %1277 = vxpose.xlu0.c.b16.cont [6/8] 0, 128
    %1278 = vxpose.xlu0.c.b16.cont [7/8] 0, 128
    %1279 = vxpose.xlu0.c.b16.end [8/8] 0, 128
    %v1280 = vpop.trf.xlu0
    %v1281 = vpop.trf.xlu0
    %v1282 = vpop.trf.xlu0
    %v1283 = vpop.trf.xlu0
    %v1284 = vpop.trf.xlu0
    %v1285 = vpop.trf.xlu0
    %v1286 = vpop.trf.xlu0
    %v1287 = vpop.trf.xlu0
    %v1289 = vunpack.c.l.b16 %v328
    %v1290 = vpack.c.b16 %v1289, %v1289
    %1291 = vrot.lane.b32.xlu0 %v1290, 64
    %v1292 = vpop.permute.xlu0 %1291
    %v1294 = vsel %vm351, %v1280, 0
    %v1297 = vsel %vm351, %v1281, 0
    %v1300 = vsel %vm351, %v1282, 0
    %v1303 = vsel %vm351, %v1283, 0
    %v1306 = vsel %vm364, %v1292, 0
    %1308 = vmatpush.bf16.msra.mxu0 0
    %1309 = vmatpush.bf16.msra.mxu0 0
    %1310 = vmatpush.bf16.msra.mxu0 0
    %1311 = vmatpush.bf16.msra.mxu0 0
    %1312 = vmatpush.bf16.msra.mxu0 0
    %1313 = vmatpush.bf16.msra.mxu0 0
    %1314 = vmatpush.bf16.msra.mxu0 0
    %1315 = vmatpush.bf16.msra.mxu0 %v1306
    %1316 = vmatmul.bf16.gmra.mxu0 %v1294
    %v1317 = vpop.f32.mrf.mxu0
    %v1318 = vadd.f32 0.0, %v1317
    %v1319 = vpop.f32.mrf.mxu0
    %v1320 = vadd.f32 0.0, %v1319
    %1321 = vmatmul.bf16.gmra.mxu0 %v1297
    %v1322 = vpop.f32.mrf.mxu0
    %v1323 = vadd.f32 0.0, %v1322
    %v1324 = vpop.f32.mrf.mxu0
    %v1325 = vadd.f32 0.0, %v1324
    %1326 = vmatmul.bf16.gmra.mxu0 %v1300
    %v1327 = vpop.f32.mrf.mxu0
    %v1328 = vadd.f32 0.0, %v1327
    %v1329 = vpop.f32.mrf.mxu0
    %v1330 = vadd.f32 0.0, %v1329
    %1331 = vmatmul.bf16.gmra.mxu0 %v1303
    %v1332 = vpop.f32.mrf.mxu0
    %v1333 = vadd.f32 0.0, %v1332
    %v1334 = vpop.f32.mrf.mxu0
    %v1335 = vadd.f32 0.0, %v1334
    %1336 = vdwg.mxu0
    %v1338 = vunpack.c.l.b16 %v325
    %v1339 = vpack.c.b16 %v1338, %v1338
    %1340 = vrot.lane.b32.xlu0 %v1339, 64
    %v1341 = vpop.permute.xlu0 %1340
    %1343 = vxpose.xlu0.c.b16.start [1/8] %v1341, 128
    %1344 = vxpose.xlu0.c.b16.cont [2/8] 0, 128
    %1345 = vxpose.xlu0.c.b16.cont [3/8] 0, 128
    %1346 = vxpose.xlu0.c.b16.cont [4/8] 0, 128
    %1347 = vxpose.xlu0.c.b16.cont [5/8] 0, 128
    %1348 = vxpose.xlu0.c.b16.cont [6/8] 0, 128
    %1349 = vxpose.xlu0.c.b16.cont [7/8] 0, 128
    %1350 = vxpose.xlu0.c.b16.end [8/8] 0, 128
    %v1351 = vpop.trf.xlu0
    %v1352 = vpop.trf.xlu0
    %v1353 = vpop.trf.xlu0
    %v1354 = vpop.trf.xlu0
    %v1355 = vpop.trf.xlu0
    %v1356 = vpop.trf.xlu0
    %v1357 = vpop.trf.xlu0
    %v1358 = vpop.trf.xlu0
    %v1360 = vunpack.c.l.b16 %v329
    %v1361 = vpack.c.b16 %v1360, %v1360
    %1362 = vrot.lane.b32.xlu0 %v1361, 64
    %v1363 = vpop.permute.xlu0 %1362
    %v1365 = vsel %vm351, %v1351, 0
    %v1368 = vsel %vm351, %v1352, 0
    %v1371 = vsel %vm351, %v1353, 0
    %v1374 = vsel %vm351, %v1354, 0
    %v1377 = vsel %vm364, %v1363, 0
    %1379 = vmatpush.bf16.msra.mxu0 0
    %1380 = vmatpush.bf16.msra.mxu0 0
    %1381 = vmatpush.bf16.msra.mxu0 0
    %1382 = vmatpush.bf16.msra.mxu0 0
    %1383 = vmatpush.bf16.msra.mxu0 0
    %1384 = vmatpush.bf16.msra.mxu0 0
    %1385 = vmatpush.bf16.msra.mxu0 0
    %1386 = vmatpush.bf16.msra.mxu0 %v1377
    %1387 = vmatmul.bf16.gmra.mxu0 %v1365
    %v1388 = vpop.f32.mrf.mxu0
    %v1389 = vadd.f32 0.0, %v1388
    %v1390 = vpop.f32.mrf.mxu0
    %v1391 = vadd.f32 0.0, %v1390
    %1392 = vmatmul.bf16.gmra.mxu0 %v1368
    %v1393 = vpop.f32.mrf.mxu0
    %v1394 = vadd.f32 0.0, %v1393
    %v1395 = vpop.f32.mrf.mxu0
    %v1396 = vadd.f32 0.0, %v1395
    %1397 = vmatmul.bf16.gmra.mxu0 %v1371
    %v1398 = vpop.f32.mrf.mxu0
    %v1399 = vadd.f32 0.0, %v1398
    %v1400 = vpop.f32.mrf.mxu0
    %v1401 = vadd.f32 0.0, %v1400
    %1402 = vmatmul.bf16.gmra.mxu0 %v1374
    %v1403 = vpop.f32.mrf.mxu0
    %v1404 = vadd.f32 0.0, %v1403
    %v1405 = vpop.f32.mrf.mxu0
    %v1406 = vadd.f32 0.0, %v1405
    %1407 = vdwg.mxu0
    %v1409 = vunpack.c.l.b16 %v326
    %v1410 = vpack.c.b16 %v1409, %v1409
    %1411 = vrot.lane.b32.xlu0 %v1410, 64
    %v1412 = vpop.permute.xlu0 %1411
    %1414 = vxpose.xlu0.c.b16.start [1/8] %v1412, 128
    %1415 = vxpose.xlu0.c.b16.cont [2/8] 0, 128
    %1416 = vxpose.xlu0.c.b16.cont [3/8] 0, 128
    %1417 = vxpose.xlu0.c.b16.cont [4/8] 0, 128
    %1418 = vxpose.xlu0.c.b16.cont [5/8] 0, 128
    %1419 = vxpose.xlu0.c.b16.cont [6/8] 0, 128
    %1420 = vxpose.xlu0.c.b16.cont [7/8] 0, 128
    %1421 = vxpose.xlu0.c.b16.end [8/8] 0, 128
    %v1422 = vpop.trf.xlu0
    %v1423 = vpop.trf.xlu0
    %v1424 = vpop.trf.xlu0
    %v1425 = vpop.trf.xlu0
    %v1426 = vpop.trf.xlu0
    %v1427 = vpop.trf.xlu0
    %v1428 = vpop.trf.xlu0
    %v1429 = vpop.trf.xlu0
    %v1431 = vunpack.c.l.b16 %v330
    %v1432 = vpack.c.b16 %v1431, %v1431
    %1433 = vrot.lane.b32.xlu0 %v1432, 64
    %v1434 = vpop.permute.xlu0 %1433
    %v1436 = vsel %vm351, %v1422, 0
    %v1439 = vsel %vm351, %v1423, 0
    %v1442 = vsel %vm351, %v1424, 0
    %v1445 = vsel %vm351, %v1425, 0
    %v1448 = vsel %vm364, %v1434, 0
    %1450 = vmatpush.bf16.msra.mxu0 0
    %1451 = vmatpush.bf16.msra.mxu0 0
    %1452 = vmatpush.bf16.msra.mxu0 0
    %1453 = vmatpush.bf16.msra.mxu0 0
    %1454 = vmatpush.bf16.msra.mxu0 0
    %1455 = vmatpush.bf16.msra.mxu0 0
    %1456 = vmatpush.bf16.msra.mxu0 0
    %1457 = vmatpush.bf16.msra.mxu0 %v1448
    %1458 = vmatmul.bf16.gmra.mxu0 %v1436
    %v1459 = vpop.f32.mrf.mxu0
    %v1460 = vadd.f32 0.0, %v1459
    %v1461 = vpop.f32.mrf.mxu0
    %v1462 = vadd.f32 0.0, %v1461
    %1463 = vmatmul.bf16.gmra.mxu0 %v1439
    %v1464 = vpop.f32.mrf.mxu0
    %v1465 = vadd.f32 0.0, %v1464
    %v1466 = vpop.f32.mrf.mxu0
    %v1467 = vadd.f32 0.0, %v1466
    %1468 = vmatmul.bf16.gmra.mxu0 %v1442
    %v1469 = vpop.f32.mrf.mxu0
    %v1470 = vadd.f32 0.0, %v1469
    %v1471 = vpop.f32.mrf.mxu0
    %v1472 = vadd.f32 0.0, %v1471
    %1473 = vmatmul.bf16.gmra.mxu0 %v1445
    %v1474 = vpop.f32.mrf.mxu0
    %v1475 = vadd.f32 0.0, %v1474
    %v1476 = vpop.f32.mrf.mxu0
    %v1477 = vadd.f32 0.0, %v1476
    %1478 = vdwg.mxu0
    %v1479 = vmul.f32 %v1247, 0.35355338
    %v1480 = vmul.f32 %v1249, 0.35355338
    %v1481 = vmul.f32 %v1252, 0.35355338
    %v1482 = vmul.f32 %v1254, 0.35355338
    %v1483 = vmul.f32 %v1257, 0.35355338
    %v1484 = vmul.f32 %v1259, 0.35355338
    %v1485 = vmul.f32 %v1262, 0.35355338
    %v1486 = vmul.f32 %v1264, 0.35355338
    %v1487 = vmul.f32 %v1318, 0.35355338
    %v1488 = vmul.f32 %v1320, 0.35355338
    %v1489 = vmul.f32 %v1323, 0.35355338
    %v1490 = vmul.f32 %v1325, 0.35355338
    %v1491 = vmul.f32 %v1328, 0.35355338
    %v1492 = vmul.f32 %v1330, 0.35355338
    %v1493 = vmul.f32 %v1333, 0.35355338
    %v1494 = vmul.f32 %v1335, 0.35355338
    %v1495 = vmul.f32 %v1389, 0.35355338
    %v1496 = vmul.f32 %v1391, 0.35355338
    %v1497 = vmul.f32 %v1394, 0.35355338
    %v1498 = vmul.f32 %v1396, 0.35355338
    %v1499 = vmul.f32 %v1399, 0.35355338
    %v1500 = vmul.f32 %v1401, 0.35355338
    %v1501 = vmul.f32 %v1404, 0.35355338
    %v1502 = vmul.f32 %v1406, 0.35355338
    %v1503 = vmul.f32 %v1460, 0.35355338
    %v1504 = vmul.f32 %v1462, 0.35355338
    %v1505 = vmul.f32 %v1465, 0.35355338
    %v1506 = vmul.f32 %v1467, 0.35355338
    %v1507 = vmul.f32 %v1470, 0.35355338
    %v1508 = vmul.f32 %v1472, 0.35355338
    %v1509 = vmul.f32 %v1475, 0.35355338
    %v1510 = vmul.f32 %v1477, 0.35355338
    %v1511 = vsel %vm609, %v1479, -inf
    %1512 = vmax.xlane.f32.xlu0 %v1511
    %v1513 = vpop.xlane.xlu0 %1512
    %v1514 = vsel %vm609, %v1480, -inf
    %1515 = vmax.xlane.f32.xlu0 %v1514
    %v1516 = vpop.xlane.xlu0 %1515
    %v1517 = vsel %vm609, %v1481, -inf
    %1518 = vmax.xlane.f32.xlu0 %v1517
    %v1519 = vpop.xlane.xlu0 %1518
    %v1520 = vsel %vm609, %v1482, -inf
    %1521 = vmax.xlane.f32.xlu0 %v1520
    %v1522 = vpop.xlane.xlu0 %1521
    %v1523 = vsel %vm609, %v1483, -inf
    %1524 = vmax.xlane.f32.xlu0 %v1523
    %v1525 = vpop.xlane.xlu0 %1524
    %v1526 = vsel %vm609, %v1484, -inf
    %1527 = vmax.xlane.f32.xlu0 %v1526
    %v1528 = vpop.xlane.xlu0 %1527
    %v1529 = vsel %vm609, %v1485, -inf
    %1530 = vmax.xlane.f32.xlu0 %v1529
    %v1531 = vpop.xlane.xlu0 %1530
    %v1532 = vsel %vm609, %v1486, -inf
    %1533 = vmax.xlane.f32.xlu0 %v1532
    %v1534 = vpop.xlane.xlu0 %1533
    %v1535 = vsel %vm609, %v1487, -inf
    %1536 = vmax.xlane.f32.xlu0 %v1535
    %v1537 = vpop.xlane.xlu0 %1536
    %v1538 = vsel %vm609, %v1488, -inf
    %1539 = vmax.xlane.f32.xlu0 %v1538
    %v1540 = vpop.xlane.xlu0 %1539
    %v1541 = vsel %vm609, %v1489, -inf
    %1542 = vmax.xlane.f32.xlu0 %v1541
    %v1543 = vpop.xlane.xlu0 %1542
    %v1544 = vsel %vm609, %v1490, -inf
    %1545 = vmax.xlane.f32.xlu0 %v1544
    %v1546 = vpop.xlane.xlu0 %1545
    %v1547 = vsel %vm609, %v1491, -inf
    %1548 = vmax.xlane.f32.xlu0 %v1547
    %v1549 = vpop.xlane.xlu0 %1548
    %v1550 = vsel %vm609, %v1492, -inf
    %1551 = vmax.xlane.f32.xlu0 %v1550
    %v1552 = vpop.xlane.xlu0 %1551
    %v1553 = vsel %vm609, %v1493, -inf
    %1554 = vmax.xlane.f32.xlu0 %v1553
    %v1555 = vpop.xlane.xlu0 %1554
    %v1556 = vsel %vm609, %v1494, -inf
    %1557 = vmax.xlane.f32.xlu0 %v1556
    %v1558 = vpop.xlane.xlu0 %1557
    %v1559 = vsel %vm609, %v1495, -inf
    %1560 = vmax.xlane.f32.xlu0 %v1559
    %v1561 = vpop.xlane.xlu0 %1560
    %v1562 = vsel %vm609, %v1496, -inf
    %1563 = vmax.xlane.f32.xlu0 %v1562
    %v1564 = vpop.xlane.xlu0 %1563
    %v1565 = vsel %vm609, %v1497, -inf
    %1566 = vmax.xlane.f32.xlu0 %v1565
    %v1567 = vpop.xlane.xlu0 %1566
    %v1568 = vsel %vm609, %v1498, -inf
    %1569 = vmax.xlane.f32.xlu0 %v1568
    %v1570 = vpop.xlane.xlu0 %1569
    %v1571 = vsel %vm609, %v1499, -inf
    %1572 = vmax.xlane.f32.xlu0 %v1571
    %v1573 = vpop.xlane.xlu0 %1572
    %v1574 = vsel %vm609, %v1500, -inf
    %1575 = vmax.xlane.f32.xlu0 %v1574
    %v1576 = vpop.xlane.xlu0 %1575
    %v1577 = vsel %vm609, %v1501, -inf
    %1578 = vmax.xlane.f32.xlu0 %v1577
    %v1579 = vpop.xlane.xlu0 %1578
    %v1580 = vsel %vm609, %v1502, -inf
    %1581 = vmax.xlane.f32.xlu0 %v1580
    %v1582 = vpop.xlane.xlu0 %1581
    %v1583 = vsel %vm609, %v1503, -inf
    %1584 = vmax.xlane.f32.xlu0 %v1583
    %v1585 = vpop.xlane.xlu0 %1584
    %v1586 = vsel %vm609, %v1504, -inf
    %1587 = vmax.xlane.f32.xlu0 %v1586
    %v1588 = vpop.xlane.xlu0 %1587
    %v1589 = vsel %vm609, %v1505, -inf
    %1590 = vmax.xlane.f32.xlu0 %v1589
    %v1591 = vpop.xlane.xlu0 %1590
    %v1592 = vsel %vm609, %v1506, -inf
    %1593 = vmax.xlane.f32.xlu0 %v1592
    %v1594 = vpop.xlane.xlu0 %1593
    %v1595 = vsel %vm609, %v1507, -inf
    %1596 = vmax.xlane.f32.xlu0 %v1595
    %v1597 = vpop.xlane.xlu0 %1596
    %v1598 = vsel %vm609, %v1508, -inf
    %1599 = vmax.xlane.f32.xlu0 %v1598
    %v1600 = vpop.xlane.xlu0 %1599
    %v1601 = vsel %vm609, %v1509, -inf
    %1602 = vmax.xlane.f32.xlu0 %v1601
    %v1603 = vpop.xlane.xlu0 %1602
    %v1604 = vsel %vm609, %v1510, -inf
    %1605 = vmax.xlane.f32.xlu0 %v1604
    %v1606 = vpop.xlane.xlu0 %1605
    %v1607 = vsub.f32 %v1479, %v1513
    %v1608 = vsub.f32 %v1480, %v1516
    %v1609 = vsub.f32 %v1481, %v1519
    %v1610 = vsub.f32 %v1482, %v1522
    %v1611 = vsub.f32 %v1483, %v1525
    %v1612 = vsub.f32 %v1484, %v1528
    %v1613 = vsub.f32 %v1485, %v1531
    %v1614 = vsub.f32 %v1486, %v1534
    %v1615 = vsub.f32 %v1487, %v1537
    %v1616 = vsub.f32 %v1488, %v1540
    %v1617 = vsub.f32 %v1489, %v1543
    %v1618 = vsub.f32 %v1490, %v1546
    %v1619 = vsub.f32 %v1491, %v1549
    %v1620 = vsub.f32 %v1492, %v1552
    %v1621 = vsub.f32 %v1493, %v1555
    %v1622 = vsub.f32 %v1494, %v1558
    %v1623 = vsub.f32 %v1495, %v1561
    %v1624 = vsub.f32 %v1496, %v1564
    %v1625 = vsub.f32 %v1497, %v1567
    %v1626 = vsub.f32 %v1498, %v1570
    %v1627 = vsub.f32 %v1499, %v1573
    %v1628 = vsub.f32 %v1500, %v1576
    %v1629 = vsub.f32 %v1501, %v1579
    %v1630 = vsub.f32 %v1502, %v1582
    %v1631 = vsub.f32 %v1503, %v1585
    %v1632 = vsub.f32 %v1504, %v1588
    %v1633 = vsub.f32 %v1505, %v1591
    %v1634 = vsub.f32 %v1506, %v1594
    %v1635 = vsub.f32 %v1507, %v1597
    %v1636 = vsub.f32 %v1508, %v1600
    %v1637 = vsub.f32 %v1509, %v1603
    %v1638 = vsub.f32 %v1510, %v1606
    %v1639 = vmul.f32 %v1607, 1.442695
    %v1640 = vpow.pop %v1639
    %v1641 = vmul.f32 %v1608, 1.442695
    %v1642 = vpow.pop %v1641
    %v1643 = vmul.f32 %v1609, 1.442695
    %v1644 = vpow.pop %v1643
    %v1645 = vmul.f32 %v1610, 1.442695
    %v1646 = vpow.pop %v1645
    %v1647 = vmul.f32 %v1611, 1.442695
    %v1648 = vpow.pop %v1647
    %v1649 = vmul.f32 %v1612, 1.442695
    %v1650 = vpow.pop %v1649
    %v1651 = vmul.f32 %v1613, 1.442695
    %v1652 = vpow.pop %v1651
    %v1653 = vmul.f32 %v1614, 1.442695
    %v1654 = vpow.pop %v1653
    %v1655 = vmul.f32 %v1615, 1.442695
    %v1656 = vpow.pop %v1655
    %v1657 = vmul.f32 %v1616, 1.442695
    %v1658 = vpow.pop %v1657
    %v1659 = vmul.f32 %v1617, 1.442695
    %v1660 = vpow.pop %v1659
    %v1661 = vmul.f32 %v1618, 1.442695
    %v1662 = vpow.pop %v1661
    %v1663 = vmul.f32 %v1619, 1.442695
    %v1664 = vpow.pop %v1663
    %v1665 = vmul.f32 %v1620, 1.442695
    %v1666 = vpow.pop %v1665
    %v1667 = vmul.f32 %v1621, 1.442695
    %v1668 = vpow.pop %v1667
    %v1669 = vmul.f32 %v1622, 1.442695
    %v1670 = vpow.pop %v1669
    %v1671 = vmul.f32 %v1623, 1.442695
    %v1672 = vpow.pop %v1671
    %v1673 = vmul.f32 %v1624, 1.442695
    %v1674 = vpow.pop %v1673
    %v1675 = vmul.f32 %v1625, 1.442695
    %v1676 = vpow.pop %v1675
    %v1677 = vmul.f32 %v1626, 1.442695
    %v1678 = vpow.pop %v1677
    %v1679 = vmul.f32 %v1627, 1.442695
    %v1680 = vpow.pop %v1679
    %v1681 = vmul.f32 %v1628, 1.442695
    %v1682 = vpow.pop %v1681
    %v1683 = vmul.f32 %v1629, 1.442695
    %v1684 = vpow.pop %v1683
    %v1685 = vmul.f32 %v1630, 1.442695
    %v1686 = vpow.pop %v1685
    %v1687 = vmul.f32 %v1631, 1.442695
    %v1688 = vpow.pop %v1687
    %v1689 = vmul.f32 %v1632, 1.442695
    %v1690 = vpow.pop %v1689
    %v1691 = vmul.f32 %v1633, 1.442695
    %v1692 = vpow.pop %v1691
    %v1693 = vmul.f32 %v1634, 1.442695
    %v1694 = vpow.pop %v1693
    %v1695 = vmul.f32 %v1635, 1.442695
    %v1696 = vpow.pop %v1695
    %v1697 = vmul.f32 %v1636, 1.442695
    %v1698 = vpow.pop %v1697
    %v1699 = vmul.f32 %v1637, 1.442695
    %v1700 = vpow.pop %v1699
    %v1701 = vmul.f32 %v1638, 1.442695
    %v1702 = vpow.pop %v1701
    %v1703 = vsel %vm609, %v1640, 0.0
    %1704 = vadd.xlane.f32.xlu0 %v1703
    %v1705 = vpop.xlane.xlu0 %1704
    %v1706 = vsel %vm609, %v1642, 0.0
    %1707 = vadd.xlane.f32.xlu0 %v1706
    %v1708 = vpop.xlane.xlu0 %1707
    %v1709 = vsel %vm609, %v1644, 0.0
    %1710 = vadd.xlane.f32.xlu0 %v1709
    %v1711 = vpop.xlane.xlu0 %1710
    %v1712 = vsel %vm609, %v1646, 0.0
    %1713 = vadd.xlane.f32.xlu0 %v1712
    %v1714 = vpop.xlane.xlu0 %1713
    %v1715 = vsel %vm609, %v1648, 0.0
    %1716 = vadd.xlane.f32.xlu0 %v1715
    %v1717 = vpop.xlane.xlu0 %1716
    %v1718 = vsel %vm609, %v1650, 0.0
    %1719 = vadd.xlane.f32.xlu0 %v1718
    %v1720 = vpop.xlane.xlu0 %1719
    %v1721 = vsel %vm609, %v1652, 0.0
    %1722 = vadd.xlane.f32.xlu0 %v1721
    %v1723 = vpop.xlane.xlu0 %1722
    %v1724 = vsel %vm609, %v1654, 0.0
    %1725 = vadd.xlane.f32.xlu0 %v1724
    %v1726 = vpop.xlane.xlu0 %1725
    %v1727 = vsel %vm609, %v1656, 0.0
    %1728 = vadd.xlane.f32.xlu0 %v1727
    %v1729 = vpop.xlane.xlu0 %1728
    %v1730 = vsel %vm609, %v1658, 0.0
    %1731 = vadd.xlane.f32.xlu0 %v1730
    %v1732 = vpop.xlane.xlu0 %1731
    %v1733 = vsel %vm609, %v1660, 0.0
    %1734 = vadd.xlane.f32.xlu0 %v1733
    %v1735 = vpop.xlane.xlu0 %1734
    %v1736 = vsel %vm609, %v1662, 0.0
    %1737 = vadd.xlane.f32.xlu0 %v1736
    %v1738 = vpop.xlane.xlu0 %1737
    %v1739 = vsel %vm609, %v1664, 0.0
    %1740 = vadd.xlane.f32.xlu0 %v1739
    %v1741 = vpop.xlane.xlu0 %1740
    %v1742 = vsel %vm609, %v1666, 0.0
    %1743 = vadd.xlane.f32.xlu0 %v1742
    %v1744 = vpop.xlane.xlu0 %1743
    %v1745 = vsel %vm609, %v1668, 0.0
    %1746 = vadd.xlane.f32.xlu0 %v1745
    %v1747 = vpop.xlane.xlu0 %1746
    %v1748 = vsel %vm609, %v1670, 0.0
    %1749 = vadd.xlane.f32.xlu0 %v1748
    %v1750 = vpop.xlane.xlu0 %1749
    %v1751 = vsel %vm609, %v1672, 0.0
    %1752 = vadd.xlane.f32.xlu0 %v1751
    %v1753 = vpop.xlane.xlu0 %1752
    %v1754 = vsel %vm609, %v1674, 0.0
    %1755 = vadd.xlane.f32.xlu0 %v1754
    %v1756 = vpop.xlane.xlu0 %1755
    %v1757 = vsel %vm609, %v1676, 0.0
    %1758 = vadd.xlane.f32.xlu0 %v1757
    %v1759 = vpop.xlane.xlu0 %1758
    %v1760 = vsel %vm609, %v1678, 0.0
    %1761 = vadd.xlane.f32.xlu0 %v1760
    %v1762 = vpop.xlane.xlu0 %1761
    %v1763 = vsel %vm609, %v1680, 0.0
    %1764 = vadd.xlane.f32.xlu0 %v1763
    %v1765 = vpop.xlane.xlu0 %1764
    %v1766 = vsel %vm609, %v1682, 0.0
    %1767 = vadd.xlane.f32.xlu0 %v1766
    %v1768 = vpop.xlane.xlu0 %1767
    %v1769 = vsel %vm609, %v1684, 0.0
    %1770 = vadd.xlane.f32.xlu0 %v1769
    %v1771 = vpop.xlane.xlu0 %1770
    %v1772 = vsel %vm609, %v1686, 0.0
    %1773 = vadd.xlane.f32.xlu0 %v1772
    %v1774 = vpop.xlane.xlu0 %1773
    %v1775 = vsel %vm609, %v1688, 0.0
    %1776 = vadd.xlane.f32.xlu0 %v1775
    %v1777 = vpop.xlane.xlu0 %1776
    %v1778 = vsel %vm609, %v1690, 0.0
    %1779 = vadd.xlane.f32.xlu0 %v1778
    %v1780 = vpop.xlane.xlu0 %1779
    %v1781 = vsel %vm609, %v1692, 0.0
    %1782 = vadd.xlane.f32.xlu0 %v1781
    %v1783 = vpop.xlane.xlu0 %1782
    %v1784 = vsel %vm609, %v1694, 0.0
    %1785 = vadd.xlane.f32.xlu0 %v1784
    %v1786 = vpop.xlane.xlu0 %1785
    %v1787 = vsel %vm609, %v1696, 0.0
    %1788 = vadd.xlane.f32.xlu0 %v1787
    %v1789 = vpop.xlane.xlu0 %1788
    %v1790 = vsel %vm609, %v1698, 0.0
    %1791 = vadd.xlane.f32.xlu0 %v1790
    %v1792 = vpop.xlane.xlu0 %1791
    %v1793 = vsel %vm609, %v1700, 0.0
    %1794 = vadd.xlane.f32.xlu0 %v1793
    %v1795 = vpop.xlane.xlu0 %1794
    %v1796 = vsel %vm609, %v1702, 0.0
    %1797 = vadd.xlane.f32.xlu0 %v1796
    %v1798 = vpop.xlane.xlu0 %1797
    %v1799 = vrcp.pop %v1705
    %v1800 = vrcp.pop %v1708
    %v1801 = vrcp.pop %v1711
    %v1802 = vrcp.pop %v1714
    %v1803 = vrcp.pop %v1717
    %v1804 = vrcp.pop %v1720
    %v1805 = vrcp.pop %v1723
    %v1806 = vrcp.pop %v1726
    %v1807 = vrcp.pop %v1729
    %v1808 = vrcp.pop %v1732
    %v1809 = vrcp.pop %v1735
    %v1810 = vrcp.pop %v1738
    %v1811 = vrcp.pop %v1741
    %v1812 = vrcp.pop %v1744
    %v1813 = vrcp.pop %v1747
    %v1814 = vrcp.pop %v1750
    %v1815 = vrcp.pop %v1753
    %v1816 = vrcp.pop %v1756
    %v1817 = vrcp.pop %v1759
    %v1818 = vrcp.pop %v1762
    %v1819 = vrcp.pop %v1765
    %v1820 = vrcp.pop %v1768
    %v1821 = vrcp.pop %v1771
    %v1822 = vrcp.pop %v1774
    %v1823 = vrcp.pop %v1777
    %v1824 = vrcp.pop %v1780
    %v1825 = vrcp.pop %v1783
    %v1826 = vrcp.pop %v1786
    %v1827 = vrcp.pop %v1789
    %v1828 = vrcp.pop %v1792
    %v1829 = vrcp.pop %v1795
    %v1830 = vrcp.pop %v1798
    %v1831 = vmul.f32 %v1640, %v1799
    %v1832 = vmul.f32 %v1642, %v1800
    %v1833 = vmul.f32 %v1644, %v1801
    %v1834 = vmul.f32 %v1646, %v1802
    %v1835 = vmul.f32 %v1648, %v1803
    %v1836 = vmul.f32 %v1650, %v1804
    %v1837 = vmul.f32 %v1652, %v1805
    %v1838 = vmul.f32 %v1654, %v1806
    %v1839 = vmul.f32 %v1656, %v1807
    %v1840 = vmul.f32 %v1658, %v1808
    %v1841 = vmul.f32 %v1660, %v1809
    %v1842 = vmul.f32 %v1662, %v1810
    %v1843 = vmul.f32 %v1664, %v1811
    %v1844 = vmul.f32 %v1666, %v1812
    %v1845 = vmul.f32 %v1668, %v1813
    %v1846 = vmul.f32 %v1670, %v1814
    %v1847 = vmul.f32 %v1672, %v1815
    %v1848 = vmul.f32 %v1674, %v1816
    %v1849 = vmul.f32 %v1676, %v1817
    %v1850 = vmul.f32 %v1678, %v1818
    %v1851 = vmul.f32 %v1680, %v1819
    %v1852 = vmul.f32 %v1682, %v1820
    %v1853 = vmul.f32 %v1684, %v1821
    %v1854 = vmul.f32 %v1686, %v1822
    %v1855 = vmul.f32 %v1688, %v1823
    %v1856 = vmul.f32 %v1690, %v1824
    %v1857 = vmul.f32 %v1692, %v1825
    %v1858 = vmul.f32 %v1694, %v1826
    %v1859 = vmul.f32 %v1696, %v1827
    %v1860 = vmul.f32 %v1698, %v1828
    %v1861 = vmul.f32 %v1700, %v1829
    %v1862 = vmul.f32 %v1702, %v1830
    %v1863 = vpack.c.bf16 %v1831, %v1831
    %v1864 = vpack.c.bf16 %v1832, %v1832
    %v1865 = vpack.c.bf16 %v1833, %v1833
    %v1866 = vpack.c.bf16 %v1834, %v1834
    %v1867 = vpack.c.bf16 %v1835, %v1835
    %v1868 = vpack.c.bf16 %v1836, %v1836
    %v1869 = vpack.c.bf16 %v1837, %v1837
    %v1870 = vpack.c.bf16 %v1838, %v1838
    %v1871 = vpack.c.bf16 %v1839, %v1839
    %v1872 = vpack.c.bf16 %v1840, %v1840
    %v1873 = vpack.c.bf16 %v1841, %v1841
    %v1874 = vpack.c.bf16 %v1842, %v1842
    %v1875 = vpack.c.bf16 %v1843, %v1843
    %v1876 = vpack.c.bf16 %v1844, %v1844
    %v1877 = vpack.c.bf16 %v1845, %v1845
    %v1878 = vpack.c.bf16 %v1846, %v1846
    %v1879 = vpack.c.bf16 %v1847, %v1847
    %v1880 = vpack.c.bf16 %v1848, %v1848
    %v1881 = vpack.c.bf16 %v1849, %v1849
    %v1882 = vpack.c.bf16 %v1850, %v1850
    %v1883 = vpack.c.bf16 %v1851, %v1851
    %v1884 = vpack.c.bf16 %v1852, %v1852
    %v1885 = vpack.c.bf16 %v1853, %v1853
    %v1886 = vpack.c.bf16 %v1854, %v1854
    %v1887 = vpack.c.bf16 %v1855, %v1855
    %v1888 = vpack.c.bf16 %v1856, %v1856
    %v1889 = vpack.c.bf16 %v1857, %v1857
    %v1890 = vpack.c.bf16 %v1858, %v1858
    %v1891 = vpack.c.bf16 %v1859, %v1859
    %v1892 = vpack.c.bf16 %v1860, %v1860
    %v1893 = vpack.c.bf16 %v1861, %v1861
    %v1894 = vpack.c.bf16 %v1862, %v1862
    %v1896 = vunpack.c.l.b16 %v331
    %v1897 = vpack.c.b16 %v1896, %v1896
    %1898 = vrot.lane.b32.xlu0 %v1897, 64
    %v1899 = vpop.permute.xlu0 %1898
    %v1908 = vunpack.c.l.b16 %v1863
    %v1909 = vunpack.c.l.b16 %v1864
    %v1910 = vunpack.c.l.b16 %v1865
    %v1911 = vunpack.c.l.b16 %v1866
    %v1912 = vunpack.c.l.b16 %v1867
    %v1913 = vunpack.c.l.b16 %v1868
    %v1914 = vunpack.c.l.b16 %v1869
    %v1915 = vunpack.c.l.b16 %v1870
    %v1916 = vpack.c.b16 %v1909, %v1908
    %v1917 = vpack.c.b16 %v1911, %v1910
    %v1918 = vpack.c.b16 %v1913, %v1912
    %v1919 = vpack.c.b16 %v1915, %v1914
    %v1921 = vsel %vm609, %v1899, 0
    %v1924 = vsel %vm609, %v1916, 0
    %v1927 = vsel %vm609, %v1917, 0
    %v1930 = vsel %vm609, %v1918, 0
    %v1933 = vsel %vm609, %v1919, 0
    %1935 = vmatpush.bf16.xpose.msra.mxu0 0
    %1936 = vmatpush.bf16.xpose.msra.mxu0 0
    %1937 = vmatpush.bf16.xpose.msra.mxu0 0
    %1938 = vmatpush.bf16.xpose.msra.mxu0 0
    %1939 = vmatpush.bf16.xpose.msra.mxu0 %v1933
    %1940 = vmatpush.bf16.xpose.msra.mxu0 %v1930
    %1941 = vmatpush.bf16.xpose.msra.mxu0 %v1927
    %1942 = vmatpush.bf16.xpose.msra.mxu0 %v1924
    %1943 = vmatmul.bf16.gmra.mxu0 %v1921
    %v1944 = vpop.f32.mrf.mxu0
    %v1945 = vadd.f32 0.0, %v1944
    %v1946 = vpop.f32.mrf.mxu0
    %1947 = vdwg.mxu0
    %v1949 = vunpack.c.l.b16 %v332
    %v1950 = vpack.c.b16 %v1949, %v1949
    %1951 = vrot.lane.b32.xlu0 %v1950, 64
    %v1952 = vpop.permute.xlu0 %1951
    %v1961 = vunpack.c.l.b16 %v1871
    %v1962 = vunpack.c.l.b16 %v1872
    %v1963 = vunpack.c.l.b16 %v1873
    %v1964 = vunpack.c.l.b16 %v1874
    %v1965 = vunpack.c.l.b16 %v1875
    %v1966 = vunpack.c.l.b16 %v1876
    %v1967 = vunpack.c.l.b16 %v1877
    %v1968 = vunpack.c.l.b16 %v1878
    %v1969 = vpack.c.b16 %v1962, %v1961
    %v1970 = vpack.c.b16 %v1964, %v1963
    %v1971 = vpack.c.b16 %v1966, %v1965
    %v1972 = vpack.c.b16 %v1968, %v1967
    %v1974 = vsel %vm609, %v1952, 0
    %v1977 = vsel %vm609, %v1969, 0
    %v1980 = vsel %vm609, %v1970, 0
    %v1983 = vsel %vm609, %v1971, 0
    %v1986 = vsel %vm609, %v1972, 0
    %1988 = vmatpush.bf16.xpose.msra.mxu0 0
    %1989 = vmatpush.bf16.xpose.msra.mxu0 0
    %1990 = vmatpush.bf16.xpose.msra.mxu0 0
    %1991 = vmatpush.bf16.xpose.msra.mxu0 0
    %1992 = vmatpush.bf16.xpose.msra.mxu0 %v1986
    %1993 = vmatpush.bf16.xpose.msra.mxu0 %v1983
    %1994 = vmatpush.bf16.xpose.msra.mxu0 %v1980
    %1995 = vmatpush.bf16.xpose.msra.mxu0 %v1977
    %1996 = vmatmul.bf16.gmra.mxu0 %v1974
    %v1997 = vpop.f32.mrf.mxu0
    %v1998 = vadd.f32 0.0, %v1997
    %v1999 = vpop.f32.mrf.mxu0
    %2000 = vdwg.mxu0
    %v2002 = vunpack.c.l.b16 %v333
    %v2003 = vpack.c.b16 %v2002, %v2002
    %2004 = vrot.lane.b32.xlu0 %v2003, 64
    %v2005 = vpop.permute.xlu0 %2004
    %v2014 = vunpack.c.l.b16 %v1879
    %v2015 = vunpack.c.l.b16 %v1880
    %v2016 = vunpack.c.l.b16 %v1881
    %v2017 = vunpack.c.l.b16 %v1882
    %v2018 = vunpack.c.l.b16 %v1883
    %v2019 = vunpack.c.l.b16 %v1884
    %v2020 = vunpack.c.l.b16 %v1885
    %v2021 = vunpack.c.l.b16 %v1886
    %v2022 = vpack.c.b16 %v2015, %v2014
    %v2023 = vpack.c.b16 %v2017, %v2016
    %v2024 = vpack.c.b16 %v2019, %v2018
    %v2025 = vpack.c.b16 %v2021, %v2020
    %v2027 = vsel %vm609, %v2005, 0
    %v2030 = vsel %vm609, %v2022, 0
    %v2033 = vsel %vm609, %v2023, 0
    %v2036 = vsel %vm609, %v2024, 0
    %v2039 = vsel %vm609, %v2025, 0
    %2041 = vmatpush.bf16.xpose.msra.mxu0 0
    %2042 = vmatpush.bf16.xpose.msra.mxu0 0
    %2043 = vmatpush.bf16.xpose.msra.mxu0 0
    %2044 = vmatpush.bf16.xpose.msra.mxu0 0
    %2045 = vmatpush.bf16.xpose.msra.mxu0 %v2039
    %2046 = vmatpush.bf16.xpose.msra.mxu0 %v2036
    %2047 = vmatpush.bf16.xpose.msra.mxu0 %v2033
    %2048 = vmatpush.bf16.xpose.msra.mxu0 %v2030
    %2049 = vmatmul.bf16.gmra.mxu0 %v2027
    %v2050 = vpop.f32.mrf.mxu0
    %v2051 = vadd.f32 0.0, %v2050
    %v2052 = vpop.f32.mrf.mxu0
    %2053 = vdwg.mxu0
    %v2055 = vunpack.c.l.b16 %v334
    %v2056 = vpack.c.b16 %v2055, %v2055
    %2057 = vrot.lane.b32.xlu0 %v2056, 64
    %v2058 = vpop.permute.xlu0 %2057
    %v2067 = vunpack.c.l.b16 %v1887
    %v2068 = vunpack.c.l.b16 %v1888
    %v2069 = vunpack.c.l.b16 %v1889
    %v2070 = vunpack.c.l.b16 %v1890
    %v2071 = vunpack.c.l.b16 %v1891
    %v2072 = vunpack.c.l.b16 %v1892
    %v2073 = vunpack.c.l.b16 %v1893
    %v2074 = vunpack.c.l.b16 %v1894
    %v2075 = vpack.c.b16 %v2068, %v2067
    %v2076 = vpack.c.b16 %v2070, %v2069
    %v2077 = vpack.c.b16 %v2072, %v2071
    %v2078 = vpack.c.b16 %v2074, %v2073
    %v2080 = vsel %vm609, %v2058, 0
    %v2083 = vsel %vm609, %v2075, 0
    %v2086 = vsel %vm609, %v2076, 0
    %v2089 = vsel %vm609, %v2077, 0
    %v2092 = vsel %vm609, %v2078, 0
    %2094 = vmatpush.bf16.xpose.msra.mxu0 0
    %2095 = vmatpush.bf16.xpose.msra.mxu0 0
    %2096 = vmatpush.bf16.xpose.msra.mxu0 0
    %2097 = vmatpush.bf16.xpose.msra.mxu0 0
    %2098 = vmatpush.bf16.xpose.msra.mxu0 %v2092
    %2099 = vmatpush.bf16.xpose.msra.mxu0 %v2089
    %2100 = vmatpush.bf16.xpose.msra.mxu0 %v2086
    %2101 = vmatpush.bf16.xpose.msra.mxu0 %v2083
    %2102 = vmatmul.bf16.gmra.mxu0 %v2080
    %v2103 = vpop.f32.mrf.mxu0
    %v2104 = vadd.f32 0.0, %v2103
    %v2105 = vpop.f32.mrf.mxu0
    %2106 = vdwg.mxu0
    %v2107 = vpack.c.bf16 %v1945, %v1945
    %v2108 = vpack.c.bf16 %v1998, %v1998
    %v2109 = vpack.c.bf16 %v2051, %v2051
    %v2110 = vpack.c.bf16 %v2104, %v2104
    %2115 = vrot.lane.b32.xlu0 %v2107, 64
    %v2116 = vpop.permute.xlu0 %2115
    %2117 = vrot.lane.b32.xlu0 %v2108, 64
    %v2118 = vpop.permute.xlu0 %2117
    %2119 = vrot.lane.b32.xlu0 %v2109, 64
    %v2120 = vpop.permute.xlu0 %2119
    %2121 = vrot.lane.b32.xlu0 %v2110, 64
    %v2122 = vpop.permute.xlu0 %2121
    %vm2127 = vcmask 1043968
    %2128 = vst.msk [vmem:[#allocation2] sm:$0xf] %vm2127, %v2116
    %2129 = vst.msk [vmem:[#allocation2 + $0x4] sm:$0xf] %vm2127, %v2118
    %2130 = vst.msk [vmem:[#allocation2 + $0x8] sm:$0xf] %vm2127, %v2120
    %2131 = vst.msk [vmem:[#allocation2 + $0xc] sm:$0xf] %vm2127, %v2122
    %v2132 = vld [vmem:[%s5] sm:$0xf]
    %v2133 = vld [vmem:[%s5 + $0x4] sm:$0xf]
    %v2134 = vld [vmem:[%s5 + $0x8] sm:$0xf]
    %v2135 = vld [vmem:[%s5 + $0xc] sm:$0xf]
    %v2136 = vld [vmem:[#allocation2] sm:$0xf]
    %v2137 = vld [vmem:[#allocation2 + $0x4] sm:$0xf]
    %v2138 = vld [vmem:[#allocation2 + $0x8] sm:$0xf]
    %v2139 = vld [vmem:[#allocation2 + $0xc] sm:$0xf]
    %v2140 = vld [vmem:[%s6] sm:$0xff]
    %v2141 = vld [vmem:[%s6 + $0x8] sm:$0xff]
    %v2142 = vld [vmem:[%s6 + $0x10] sm:$0xff]
    %v2143 = vld [vmem:[%s6 + $0x18] sm:$0xff]
    %2145 = vset.pattern.permute.xlu0 0
    %2146 = vperm.xlu0 %2145, %v2140
    %v2147 = vpop.permute.xlu0 %2146
    %2150 = vset.pattern.permute.xlu0 0
    %2151 = vperm.xlu0 %2150, %v2141
    %v2152 = vpop.permute.xlu0 %2151
    %2155 = vset.pattern.permute.xlu0 0
    %2156 = vperm.xlu0 %2155, %v2142
    %v2157 = vpop.permute.xlu0 %2156
    %2160 = vset.pattern.permute.xlu0 0
    %2161 = vperm.xlu0 %2160, %v2143
    %v2162 = vpop.permute.xlu0 %2161
    %v2168 = vunpack.c.l.b16 %v2132
    %v2169 = vunpack.c.l.b16 %v2133
    %v2170 = vunpack.c.l.b16 %v2134
    %v2171 = vunpack.c.l.b16 %v2135
    %v2172 = vpack.c.b16 %v2169, %v2168
    %v2173 = vpack.c.b16 %v2171, %v2170
    %v2178 = vunpack.c.l.b16 %v2136
    %v2179 = vunpack.c.l.b16 %v2137
    %v2180 = vunpack.c.l.b16 %v2138
    %v2181 = vunpack.c.l.b16 %v2139
    %v2182 = vpack.c.b16 %v2179, %v2178
    %v2183 = vpack.c.b16 %v2181, %v2180
    %v2187 = vsel %vm265, %v2172, 0
    %v2190 = vsel %vm265, %v2173, 0
    %2192 = vmatpush.bf16.msra.mxu0 0
    %2193 = vmatpush.bf16.msra.mxu0 0
    %2194 = vmatpush.bf16.msra.mxu0 0
    %2195 = vmatpush.bf16.msra.mxu0 0
    %2196 = vmatpush.bf16.msra.mxu0 0
    %2197 = vmatpush.bf16.msra.mxu0 0
    %2198 = vmatpush.bf16.msra.mxu0 %v2183
    %2199 = vmatpush.bf16.msra.mxu0 %v2182
    %2200 = vmatmul.bf16.gmra.mxu0 %v2187
    %v2201 = vpop.f32.mrf.mxu0
    %v2202 = vadd.f32 %v2147, %v2201
    %v2203 = vpop.f32.mrf.mxu0
    %v2204 = vadd.f32 %v2152, %v2203
    %2205 = vmatmul.bf16.gmra.mxu0 %v2190
    %v2206 = vpop.f32.mrf.mxu0
    %v2207 = vadd.f32 %v2157, %v2206
    %v2208 = vpop.f32.mrf.mxu0
    %v2209 = vadd.f32 %v2162, %v2208
    %2210 = vdwg.mxu0
    %v2211 = vadd.f32 %v46, %v2202
    %v2212 = vadd.f32 %v47, %v2204
    %v2213 = vadd.f32 %v48, %v2207
    %v2214 = vadd.f32 %v49, %v2209
    %v2215 = vld [vmem:[%s7] sm:$0xff]
    %v2216 = vld [vmem:[%s7 + $0x8] sm:$0xff]
    %v2217 = vld [vmem:[%s7 + $0x10] sm:$0xff]
    %v2218 = vld [vmem:[%s7 + $0x18] sm:$0xff]
    %v2219 = vld [vmem:[%s8] sm:$0xff]
    %v2220 = vld [vmem:[%s8 + $0x8] sm:$0xff]
    %v2221 = vld [vmem:[%s8 + $0x10] sm:$0xff]
    %v2222 = vld [vmem:[%s8 + $0x18] sm:$0xff]
    %v2223 = vadd.f32 %v2211, %v2212
    %v2224 = vadd.f32 %v2223, %v2213
    %v2225 = vadd.f32 %v2224, %v2214
    %v2226 = vrot.slane %v2225, 4
    %v2227 = vadd.f32 %v2225, %v2226
    %v2228 = vrot.slane %v2227, 2
    %v2229 = vadd.f32 %v2227, %v2228
    %v2230 = vrot.slane %v2229, 1
    %v2231 = vadd.f32 %v2229, %v2230
    %v2232 = vmul.f32 %v2231, 0.03125
    %v2233 = vsub.f32 %v2211, %v2232
    %v2234 = vsub.f32 %v2212, %v2232
    %v2235 = vsub.f32 %v2213, %v2232
    %v2236 = vsub.f32 %v2214, %v2232
    %v2237 = vmul.f32 %v2233, %v2233
    %v2238 = vmul.f32 %v2234, %v2234
    %v2239 = vmul.f32 %v2235, %v2235
    %v2240 = vmul.f32 %v2236, %v2236
    %v2241 = vadd.f32 %v2237, %v2238
    %v2242 = vadd.f32 %v2241, %v2239
    %v2243 = vadd.f32 %v2242, %v2240
    %v2244 = vrot.slane %v2243, 4
    %v2245 = vadd.f32 %v2243, %v2244
    %v2246 = vrot.slane %v2245, 2
    %v2247 = vadd.f32 %v2245, %v2246
    %v2248 = vrot.slane %v2247, 1
    %v2249 = vadd.f32 %v2247, %v2248
    %v2250 = vmul.f32 %v2249, 0.03125
    %v2251 = vadd.f32 %v2250, 1e-05
    %v2252 = vrsqrt.pop %v2251
    %v2253 = vmul.f32 %v2252, %v2251
    %v2254 = vmul.f32 %v2253, %v2252
    %v2255 = vmul.f32 0.5, %v2254
    %v2256 = vsub.f32 1.5, %v2255
    %v2257 = vmul.f32 %v2252, %v2256
    %vm2258 = vweird.f32 %v2251
    %vm2259 = vweird.f32 %v2252
    %vm2260 = vmor %vm2258, %vm2259
    %v2261 = vsel %vm2260, %v2252, %v2257
    %v2262 = vmul.f32 %v2233, %v2261
    %v2263 = vmul.f32 %v2234, %v2261
    %v2264 = vmul.f32 %v2235, %v2261
    %v2265 = vmul.f32 %v2236, %v2261
    %2267 = vset.pattern.permute.xlu0 0
    %2268 = vperm.xlu0 %2267, %v2215
    %v2269 = vpop.permute.xlu0 %2268
    %2272 = vset.pattern.permute.xlu0 0
    %2273 = vperm.xlu0 %2272, %v2216
    %v2274 = vpop.permute.xlu0 %2273
    %2277 = vset.pattern.permute.xlu0 0
    %2278 = vperm.xlu0 %2277, %v2217
    %v2279 = vpop.permute.xlu0 %2278
    %2282 = vset.pattern.permute.xlu0 0
    %2283 = vperm.xlu0 %2282, %v2218
    %v2284 = vpop.permute.xlu0 %2283
    %v2286 = vmul.f32 %v2262, %v2269
    %v2287 = vmul.f32 %v2263, %v2274
    %v2288 = vmul.f32 %v2264, %v2279
    %v2289 = vmul.f32 %v2265, %v2284
    %2291 = vset.pattern.permute.xlu0 0
    %2292 = vperm.xlu0 %2291, %v2219
    %v2293 = vpop.permute.xlu0 %2292
    %2296 = vset.pattern.permute.xlu0 0
    %2297 = vperm.xlu0 %2296, %v2220
    %v2298 = vpop.permute.xlu0 %2297
    %2301 = vset.pattern.permute.xlu0 0
    %2302 = vperm.xlu0 %2301, %v2221
    %v2303 = vpop.permute.xlu0 %2302
    %2306 = vset.pattern.permute.xlu0 0
    %2307 = vperm.xlu0 %2306, %v2222
    %v2308 = vpop.permute.xlu0 %2307
    %v2310 = vadd.f32 %v2286, %v2293
    %v2311 = vadd.f32 %v2287, %v2298
    %v2312 = vadd.f32 %v2288, %v2303
    %v2313 = vadd.f32 %v2289, %v2308
    %v2314 = vld [vmem:[%s9] sm:$0xf]
    %v2315 = vld [vmem:[%s9 + $0x4] sm:$0xf]
    %v2316 = vld [vmem:[%s9 + $0x8] sm:$0xf]
    %v2317 = vld [vmem:[%s9 + $0xc] sm:$0xf]
    %v2318 = vpack.c.bf16 %v2311, %v2310
    %v2319 = vpack.c.bf16 %v2313, %v2312
    %v2320 = vld [vmem:[%s10] sm:$0xff]
    %v2321 = vld [vmem:[%s10 + $0x8] sm:$0xff]
    %v2322 = vld [vmem:[%s10 + $0x10] sm:$0xff]
    %v2323 = vld [vmem:[%s10 + $0x18] sm:$0xff]
    %2325 = vset.pattern.permute.xlu0 0
    %2326 = vperm.xlu0 %2325, %v2320
    %v2327 = vpop.permute.xlu0 %2326
    %2330 = vset.pattern.permute.xlu0 0
    %2331 = vperm.xlu0 %2330, %v2321
    %v2332 = vpop.permute.xlu0 %2331
    %2335 = vset.pattern.permute.xlu0 0
    %2336 = vperm.xlu0 %2335, %v2322
    %v2337 = vpop.permute.xlu0 %2336
    %2340 = vset.pattern.permute.xlu0 0
    %2341 = vperm.xlu0 %2340, %v2323
    %v2342 = vpop.permute.xlu0 %2341
    %v2348 = vunpack.c.l.b16 %v2314
    %v2349 = vunpack.c.l.b16 %v2315
    %v2350 = vunpack.c.l.b16 %v2316
    %v2351 = vunpack.c.l.b16 %v2317
    %v2352 = vpack.c.b16 %v2349, %v2348
    %v2353 = vpack.c.b16 %v2351, %v2350
    %v2355 = vsel %vm265, %v2352, 0
    %v2358 = vsel %vm265, %v2353, 0
    %2360 = vmatpush.bf16.msra.mxu0 0
    %2361 = vmatpush.bf16.msra.mxu0 0
    %2362 = vmatpush.bf16.msra.mxu0 0
    %2363 = vmatpush.bf16.msra.mxu0 0
    %2364 = vmatpush.bf16.msra.mxu0 0
    %2365 = vmatpush.bf16.msra.mxu0 0
    %2366 = vmatpush.bf16.msra.mxu0 %v2319
    %2367 = vmatpush.bf16.msra.mxu0 %v2318
    %2368 = vmatmul.bf16.gmra.mxu0 %v2355
    %v2369 = vpop.f32.mrf.mxu0
    %v2370 = vadd.f32 %v2327, %v2369
    %v2371 = vpop.f32.mrf.mxu0
    %v2372 = vadd.f32 %v2332, %v2371
    %2373 = vmatmul.bf16.gmra.mxu0 %v2358
    %v2374 = vpop.f32.mrf.mxu0
    %v2375 = vadd.f32 %v2337, %v2374
    %v2376 = vpop.f32.mrf.mxu0
    %v2377 = vadd.f32 %v2342, %v2376
    %2378 = vdwg.mxu0
    %v2379 = vmul.f32 %v2370, 0.5
    %v2380 = vmul.f32 %v2372, 0.5
    %v2381 = vmul.f32 %v2375, 0.5
    %v2382 = vmul.f32 %v2377, 0.5
    %v2383 = vmul.f32 %v2370, 0.70710677
    %v2384 = vmul.f32 %v2372, 0.70710677
    %v2385 = vmul.f32 %v2375, 0.70710677
    %v2386 = vmul.f32 %v2377, 0.70710677
    %v2387 = vmul.f32 %v2383, %v2383
    %v2388 = vmin.f32 16.0, %v2387
    %v2389 = vmul.f32 %v2388, 2.1237322e-06
    %v2390 = vadd.f32 %v2389, 0.00028619796
    %v2391 = vmul.f32 %v2388, %v2390
    %v2392 = vadd.f32 %v2391, 0.0036580483
    %v2393 = vmul.f32 %v2388, %v2392
    %v2394 = vadd.f32 %v2393, 0.05243302
    %v2395 = vmul.f32 %v2388, %v2394
    %v2396 = vadd.f32 %v2395, 0.18741608
    %v2397 = vmul.f32 %v2388, %v2396
    %v2398 = vadd.f32 %v2397, 1.1283791
    %v2399 = vmul.f32 %v2383, %v2398
    %v2400 = vmul.f32 %v2388, 3.8918573e-05
    %v2401 = vadd.f32 %v2400, 0.001143296
    %v2402 = vmul.f32 %v2388, %v2401
    %v2403 = vadd.f32 %v2402, 0.014752088
    %v2404 = vmul.f32 %v2388, %v2403
    %v2405 = vadd.f32 %v2404, 0.112945676
    %v2406 = vmul.f32 %v2388, %v2405
    %v2407 = vadd.f32 %v2406, 0.4994258
    %v2408 = vmul.f32 %v2388, %v2407
    %v2409 = vadd.f32 %v2408, 1.0
    %v2410 = vrcp.pop %v2409
    %v2411 = vmul.f32 %v2409, %v2410
    %v2412 = vsub.f32 1.0, %v2411
    %v2413 = vmul.f32 %v2410, %v2412
    %v2414 = vadd.f32 %v2410, %v2413
    %vm2415 = vweird.f32 %v2409
    %vm2416 = vweird.f32 %v2410
    %vm2417 = vmor %vm2415, %vm2416
    %v2418 = vsel %vm2417, %v2410, %v2414
    %v2419 = vand.u32 2147483647, %v2409
    %vm2420 = vcmp.eq.f32.partialorder %v2419, 8.507059e+37
    %v2421 = vand.u32 %v2409, 2147483648
    %v2422 = vor.u32 1.1754944e-38, %v2421
    %v2423 = vsel %vm2420, %v2422, %v2418
    %v2424 = vmul.f32 %v2399, %v2423
    %v2425 = vmin.f32 %v2424, 1.0
    %v2426 = vmax.f32 %v2425, -1.0
    %v2427 = vmul.f32 %v2384, %v2384
    %v2428 = vmin.f32 16.0, %v2427
    %v2429 = vmul.f32 %v2428, 2.1237322e-06
    %v2430 = vadd.f32 %v2429, 0.00028619796
    %v2431 = vmul.f32 %v2428, %v2430
    %v2432 = vadd.f32 %v2431, 0.0036580483
    %v2433 = vmul.f32 %v2428, %v2432
    %v2434 = vadd.f32 %v2433, 0.05243302
    %v2435 = vmul.f32 %v2428, %v2434
    %v2436 = vadd.f32 %v2435, 0.18741608
    %v2437 = vmul.f32 %v2428, %v2436
    %v2438 = vadd.f32 %v2437, 1.1283791
    %v2439 = vmul.f32 %v2384, %v2438
    %v2440 = vmul.f32 %v2428, 3.8918573e-05
    %v2441 = vadd.f32 %v2440, 0.001143296
    %v2442 = vmul.f32 %v2428, %v2441
    %v2443 = vadd.f32 %v2442, 0.014752088
    %v2444 = vmul.f32 %v2428, %v2443
    %v2445 = vadd.f32 %v2444, 0.112945676
    %v2446 = vmul.f32 %v2428, %v2445
    %v2447 = vadd.f32 %v2446, 0.4994258
    %v2448 = vmul.f32 %v2428, %v2447
    %v2449 = vadd.f32 %v2448, 1.0
    %v2450 = vrcp.pop %v2449
    %v2451 = vmul.f32 %v2449, %v2450
    %v2452 = vsub.f32 1.0, %v2451
    %v2453 = vmul.f32 %v2450, %v2452
    %v2454 = vadd.f32 %v2450, %v2453
    %vm2455 = vweird.f32 %v2449
    %vm2456 = vweird.f32 %v2450
    %vm2457 = vmor %vm2455, %vm2456
    %v2458 = vsel %vm2457, %v2450, %v2454
    %v2459 = vand.u32 2147483647, %v2449
    %vm2460 = vcmp.eq.f32.partialorder %v2459, 8.507059e+37
    %v2461 = vand.u32 %v2449, 2147483648
    %v2462 = vor.u32 1.1754944e-38, %v2461
    %v2463 = vsel %vm2460, %v2462, %v2458
    %v2464 = vmul.f32 %v2439, %v2463
    %v2465 = vmin.f32 %v2464, 1.0
    %v2466 = vmax.f32 %v2465, -1.0
    %v2467 = vmul.f32 %v2385, %v2385
    %v2468 = vmin.f32 16.0, %v2467
    %v2469 = vmul.f32 %v2468, 2.1237322e-06
    %v2470 = vadd.f32 %v2469, 0.00028619796
    %v2471 = vmul.f32 %v2468, %v2470
    %v2472 = vadd.f32 %v2471, 0.0036580483
    %v2473 = vmul.f32 %v2468, %v2472
    %v2474 = vadd.f32 %v2473, 0.05243302
    %v2475 = vmul.f32 %v2468, %v2474
    %v2476 = vadd.f32 %v2475, 0.18741608
    %v2477 = vmul.f32 %v2468, %v2476
    %v2478 = vadd.f32 %v2477, 1.1283791
    %v2479 = vmul.f32 %v2385, %v2478
    %v2480 = vmul.f32 %v2468, 3.8918573e-05
    %v2481 = vadd.f32 %v2480, 0.001143296
    %v2482 = vmul.f32 %v2468, %v2481
    %v2483 = vadd.f32 %v2482, 0.014752088
    %v2484 = vmul.f32 %v2468, %v2483
    %v2485 = vadd.f32 %v2484, 0.112945676
    %v2486 = vmul.f32 %v2468, %v2485
    %v2487 = vadd.f32 %v2486, 0.4994258
    %v2488 = vmul.f32 %v2468, %v2487
    %v2489 = vadd.f32 %v2488, 1.0
    %v2490 = vrcp.pop %v2489
    %v2491 = vmul.f32 %v2489, %v2490
    %v2492 = vsub.f32 1.0, %v2491
    %v2493 = vmul.f32 %v2490, %v2492
    %v2494 = vadd.f32 %v2490, %v2493
    %vm2495 = vweird.f32 %v2489
    %vm2496 = vweird.f32 %v2490
    %vm2497 = vmor %vm2495, %vm2496
    %v2498 = vsel %vm2497, %v2490, %v2494
    %v2499 = vand.u32 2147483647, %v2489
    %vm2500 = vcmp.eq.f32.partialorder %v2499, 8.507059e+37
    %v2501 = vand.u32 %v2489, 2147483648
    %v2502 = vor.u32 1.1754944e-38, %v2501
    %v2503 = vsel %vm2500, %v2502, %v2498
    %v2504 = vmul.f32 %v2479, %v2503
    %v2505 = vmin.f32 %v2504, 1.0
    %v2506 = vmax.f32 %v2505, -1.0
    %v2507 = vmul.f32 %v2386, %v2386
    %v2508 = vmin.f32 16.0, %v2507
    %v2509 = vmul.f32 %v2508, 2.1237322e-06
    %v2510 = vadd.f32 %v2509, 0.00028619796
    %v2511 = vmul.f32 %v2508, %v2510
    %v2512 = vadd.f32 %v2511, 0.0036580483
    %v2513 = vmul.f32 %v2508, %v2512
    %v2514 = vadd.f32 %v2513, 0.05243302
    %v2515 = vmul.f32 %v2508, %v2514
    %v2516 = vadd.f32 %v2515, 0.18741608
    %v2517 = vmul.f32 %v2508, %v2516
    %v2518 = vadd.f32 %v2517, 1.1283791
    %v2519 = vmul.f32 %v2386, %v2518
    %v2520 = vmul.f32 %v2508, 3.8918573e-05
    %v2521 = vadd.f32 %v2520, 0.001143296
    %v2522 = vmul.f32 %v2508, %v2521
    %v2523 = vadd.f32 %v2522, 0.014752088
    %v2524 = vmul.f32 %v2508, %v2523
    %v2525 = vadd.f32 %v2524, 0.112945676
    %v2526 = vmul.f32 %v2508, %v2525
    %v2527 = vadd.f32 %v2526, 0.4994258
    %v2528 = vmul.f32 %v2508, %v2527
    %v2529 = vadd.f32 %v2528, 1.0
    %v2530 = vrcp.pop %v2529
    %v2531 = vmul.f32 %v2529, %v2530
    %v2532 = vsub.f32 1.0, %v2531
    %v2533 = vmul.f32 %v2530, %v2532
    %v2534 = vadd.f32 %v2530, %v2533
    %vm2535 = vweird.f32 %v2529
    %vm2536 = vweird.f32 %v2530
    %vm2537 = vmor %vm2535, %vm2536
    %v2538 = vsel %vm2537, %v2530, %v2534
    %v2539 = vand.u32 2147483647, %v2529
    %vm2540 = vcmp.eq.f32.partialorder %v2539, 8.507059e+37
    %v2541 = vand.u32 %v2529, 2147483648
    %v2542 = vor.u32 1.1754944e-38, %v2541
    %v2543 = vsel %vm2540, %v2542, %v2538
    %v2544 = vmul.f32 %v2519, %v2543
    %v2545 = vmin.f32 %v2544, 1.0
    %v2546 = vmax.f32 %v2545, -1.0
    %v2547 = vadd.f32 %v2426, 1.0
    %v2548 = vadd.f32 %v2466, 1.0
    %v2549 = vadd.f32 %v2506, 1.0
    %v2550 = vadd.f32 %v2546, 1.0
    %v2551 = vmul.f32 %v2379, %v2547
    %v2552 = vmul.f32 %v2380, %v2548
    %v2553 = vmul.f32 %v2381, %v2549
    %v2554 = vmul.f32 %v2382, %v2550
    %v2555 = vld [vmem:[%s11] sm:$0xf]
    %v2556 = vld [vmem:[%s11 + $0x4] sm:$0xf]
    %v2557 = vld [vmem:[%s11 + $0x8] sm:$0xf]
    %v2558 = vld [vmem:[%s11 + $0xc] sm:$0xf]
    %v2559 = vpack.c.bf16 %v2552, %v2551
    %v2560 = vpack.c.bf16 %v2554, %v2553
    %v2561 = vld [vmem:[%s12] sm:$0xff]
    %v2562 = vld [vmem:[%s12 + $0x8] sm:$0xff]
    %v2563 = vld [vmem:[%s12 + $0x10] sm:$0xff]
    %v2564 = vld [vmem:[%s12 + $0x18] sm:$0xff]
    %2566 = vset.pattern.permute.xlu0 0
    %2567 = vperm.xlu0 %2566, %v2561
    %v2568 = vpop.permute.xlu0 %2567
    %2571 = vset.pattern.permute.xlu0 0
    %2572 = vperm.xlu0 %2571, %v2562
    %v2573 = vpop.permute.xlu0 %2572
    %2576 = vset.pattern.permute.xlu0 0
    %2577 = vperm.xlu0 %2576, %v2563
    %v2578 = vpop.permute.xlu0 %2577
    %2581 = vset.pattern.permute.xlu0 0
    %2582 = vperm.xlu0 %2581, %v2564
    %v2583 = vpop.permute.xlu0 %2582
    %v2589 = vunpack.c.l.b16 %v2555
    %v2590 = vunpack.c.l.b16 %v2556
    %v2591 = vunpack.c.l.b16 %v2557
    %v2592 = vunpack.c.l.b16 %v2558
    %v2593 = vpack.c.b16 %v2590, %v2589
    %v2594 = vpack.c.b16 %v2592, %v2591
    %v2596 = vsel %vm265, %v2593, 0
    %v2599 = vsel %vm265, %v2594, 0
    %2601 = vmatpush.bf16.msra.mxu0 0
    %2602 = vmatpush.bf16.msra.mxu0 0
    %2603 = vmatpush.bf16.msra.mxu0 0
    %2604 = vmatpush.bf16.msra.mxu0 0
    %2605 = vmatpush.bf16.msra.mxu0 0
    %2606 = vmatpush.bf16.msra.mxu0 0
    %2607 = vmatpush.bf16.msra.mxu0 %v2560
    %2608 = vmatpush.bf16.msra.mxu0 %v2559
    %2609 = vmatmul.bf16.gmra.mxu0 %v2596
    %v2610 = vpop.f32.mrf.mxu0
    %v2611 = vadd.f32 %v2568, %v2610
    %v2612 = vpop.f32.mrf.mxu0
    %v2613 = vadd.f32 %v2573, %v2612
    %2614 = vmatmul.bf16.gmra.mxu0 %v2599
    %v2615 = vpop.f32.mrf.mxu0
    %v2616 = vadd.f32 %v2578, %v2615
    %v2617 = vpop.f32.mrf.mxu0
    %v2618 = vadd.f32 %v2583, %v2617
    %2619 = vdwg.mxu0
    %v2620 = vadd.f32 %v2211, %v2611
    %v2621 = vadd.f32 %v2212, %v2613
    %v2622 = vadd.f32 %v2213, %v2616
    %v2623 = vadd.f32 %v2214, %v2618
    %2624 = vst [vmem:[#allocation3] sm:$0xff] %v2620
    %2625 = vst [vmem:[#allocation3 + $0x8] sm:$0xff] %v2621
    %2626 = vst [vmem:[#allocation3 + $0x10] sm:$0xff] %v2622
    %2627 = vst [vmem:[#allocation3 + $0x18] sm:$0xff] %v2623
    // Predicated region
    $region54: #{tpu_custom_call.1} parent=1 // pred_check
      _
    $region55: #{tpu_custom_call.1} parent=1 // pred_check_branch
      %2629 = sbr.rel (0) target = $region57
    $region56: #{tpu_custom_call.1} parent=1 // pred_region
      %2631 = vsyncadd [#allocation4], 0
      %s2632 = sshll.u32 [#allocation3], 4
      %s2633 = int_to_ptr.vmem [resolvable:$true] %s2632
      %s2634 = sshll.u32 %s13, 4
      %s2635 = int_to_ptr.hbm [resolvable:$true] %s2634
      %2640 = dma.vmem_to_hbm [thread:$0]  %s2633, 512, %s2635, [#allocation4], 128, 128, 8
    $region57: #{tpu_custom_call.1} parent=1 // pred_fallthru
      _
    // Predicated region
    $region58: #{tpu_custom_call.1} parent=1 // pred_check
      _
    $region59: #{tpu_custom_call.1} parent=1 // pred_check_branch
      %2642 = sbr.rel (0) target = $region61
    $region60: #{tpu_custom_call.1} parent=1 // pred_region
      %2644 = dma.done [#allocation4], 512
    $region61: #{tpu_custom_call.1} parent=1 // pred_fallthru
      _
    %2645 = vsyncpa [#allocation4], 1

</llo_original>
